<compile_context>
chip_gen: v6e
topology: v6e:2x2x1
jax: 0.10.0
libtpu: 0.0.40
codegen_flags: <defaults>
</compile_context>

<pallas_src>
import functools

import jax
import jax.numpy as jnp
from jax.experimental import pallas as pl
from jax.experimental.pallas import tpu as pltpu

HIDDEN = 128
ACTOR_IN = 8
CRITIC_IN = 16
N_GROUPS = 3     # 3 categorical heads
N_CLASSES = 5    # 5 classes each -> actor output dim 15
N_LOGITS = N_GROUPS * N_CLASSES


def _agent_kernel(xa_ref, xc_ref, w1a, w1c, b1, w2, b2, w3, b3, w4, b4,
                  action_ref, aux_ref, *, compute_dtype):
    f32 = jnp.float32
    tb = xa_ref.shape[0]
    wdt = w1a.dtype          # bf16 matmul operands, f32 accumulation

    # ---------------- fused actor/critic hidden stack ----------------
    # Columns [0:H) carry the actor stream, [H:2H) the critic stream (block-diag weights),
    # so one 256-wide matmul + one tanh per layer serves both networks. Inputs arrive f32
    # and are cast to bf16 here (free VPU work hidden under the matmuls).
    pre = (jnp.dot(xa_ref[...].astype(wdt), w1a[...], preferred_element_type=f32)
           + jnp.dot(xc_ref[...].astype(wdt), w1c[...], preferred_element_type=f32)
           + b1[...])
    h = jnp.tanh(pre.astype(compute_dtype))                  # (tb, 256)
    h = jnp.tanh((jnp.dot(h.astype(wdt), w2[...], preferred_element_type=f32)
                  + b2[...]).astype(compute_dtype))
    h = jnp.tanh((jnp.dot(h.astype(wdt), w3[...], preferred_element_type=f32)
                  + b3[...]).astype(compute_dtype))
    head = jnp.dot(h.astype(wdt), w4[...], preferred_element_type=f32) + b4[...]  # (tb,16) f32

    logits = head[:, :N_LOGITS]      # (tb, 15) actor head
    value = head[:, N_LOGITS:]       # (tb, 1)  critic head

    # -------- Categorical over 3 groups of 5 lanes: argmax, log_prob, entropy --------
    # Single exp over (tb,15); single log + approx reciprocal over a packed (tb,3) slab.
    lane = jax.lax.broadcasted_iota(jnp.int32, (tb, N_LOGITS), 1)
    gmask = [(lane >= g * N_CLASSES) & (lane < (g + 1) * N_CLASSES) for g in range(N_GROUPS)]

    mx_cols = [jnp.max(jnp.where(gmask[g], logits, -1e30), axis=-1, keepdims=True)
               for g in range(N_GROUPS)]                      # 3x (tb, 1)
    mx_b = jnp.where(gmask[0], mx_cols[0],
                     jnp.where(gmask[1], mx_cols[1], mx_cols[2]))   # (tb, 15)

    z = logits - mx_b                                         # <= 0
    e_z = jnp.exp(z)                                          # ONE EUP exp pass
    ez_z = e_z * z

    def gsum(x, g):
        return jnp.sum(jnp.where(gmask[g], x, 0.0), axis=-1, keepdims=True)

    S = jnp.concatenate([gsum(e_z, g) for g in range(N_GROUPS)], axis=-1)    # (tb, 3)
    EZ = jnp.concatenate([gsum(ez_z, g) for g in range(N_GROUPS)], axis=-1)  # (tb, 3)

    logS = jnp.log(S)                                         # ONE EUP log pass
    invS = pl.reciprocal(S, approx=True)                      # EUP vrcp (cheap)

    # logprob of the argmax action per group == mx - lse == -log(S); summed over groups.
    lp_sum = -jnp.sum(logS, axis=-1, keepdims=True)           # (tb, 1)
    # entropy per group == log(S) - sum(e_z * z)/S; summed over groups.
    ent_sum = jnp.sum(logS - EZ * invS, axis=-1, keepdims=True)  # (tb, 1)

    # argmax per group: first index attaining the max (matches torch.argmax tie-break).
    is_max = logits == mx_b
    idx_cols = [jnp.min(jnp.where(is_max & gmask[g], lane - g * N_CLASSES, N_CLASSES),
                        axis=-1, keepdims=True) for g in range(N_GROUPS)]
    action = jnp.concatenate(idx_cols, axis=-1).astype(jnp.int32)   # (tb, 3)

    # Single packed stores per tile.
    action_ref[...] = action
    gcol = jax.lax.broadcasted_iota(jnp.int32, (tb, N_GROUPS), 1)
    aux_ref[...] = jnp.where(gcol == 0, lp_sum, jnp.where(gcol == 1, ent_sum, value))


def _make_params(key, hidden=HIDDEN, w_dtype=jnp.bfloat16):
    """Synthetic params mirroring layer_init (orthogonal, zero bias), pre-fused into
    block-diagonal actor+critic matrices. Weights stored in bf16 (MXU-native), biases f32."""
    ortho = jax.nn.initializers.orthogonal
    keys = jax.random.split(key, 8)
    sqrt2 = 2.0 ** 0.5

    def w(k, fi, fo, std):
        return ortho(std)(k, (fi, fo), jnp.float32)

    aw1 = w(keys[0], ACTOR_IN, hidden, sqrt2)
    aw2 = w(keys[1], hidden, hidden, sqrt2)
    aw3 = w(keys[2], hidden, hidden, sqrt2)
    aw4 = w(keys[3], hidden, N_LOGITS, 0.01)
    cw1 = w(keys[4], CRITIC_IN, hidden, sqrt2)
    cw2 = w(keys[5], hidden, hidden, sqrt2)
    cw3 = w(keys[6], hidden, hidden, sqrt2)
    cw4 = w(keys[7], hidden, 1, 1.0)

    z = lambda r, c: jnp.zeros((r, c), jnp.float32)

    def blockdiag(a, b):
        top = jnp.concatenate([a, z(a.shape[0], b.shape[1])], axis=1)
        bot = jnp.concatenate([z(b.shape[0], a.shape[1]), b], axis=1)
        return jnp.concatenate([top, bot], axis=0)

    w1a = jnp.concatenate([aw1, z(ACTOR_IN, hidden)], axis=1)    # (8,   256)
    w1c = jnp.concatenate([z(CRITIC_IN, hidden), cw1], axis=1)   # (16,  256)
    w2 = blockdiag(aw2, cw2)                                     # (256, 256)
    w3 = blockdiag(aw3, cw3)                                     # (256, 256)
    w4 = blockdiag(aw4, cw4)                                     # (256, 16)

    b1 = jnp.zeros((1, 2 * hidden), jnp.float32)
    b2 = jnp.zeros((1, 2 * hidden), jnp.float32)
    b3 = jnp.zeros((1, 2 * hidden), jnp.float32)
    b4 = jnp.zeros((1, N_LOGITS + 1), jnp.float32)

    c = lambda m: m.astype(w_dtype)
    return (c(w1a), c(w1c), b1, c(w2), b2, c(w3), b3, c(w4), b4)


def _round_up(n, m):
    return ((n + m - 1) // m) * m


def _cdiv(a, b):
    return (a + b - 1) // b


def _default_bf16_tanh():
    """bf16 tanh only where the EUP has a bf16 path (v6e / v7x); f32 elsewhere."""
    try:
        kind = jax.devices()[0].device_kind.lower()
    except Exception:
        return False
    return ("v6" in kind) or ("v7" in kind)


@functools.partial(jax.jit, static_argnames=("block_b", "bf16_tanh"))
def _agent_forward_2d(x_actor, x_critic, params, block_b=2048, bf16_tanh=False):
    B = x_actor.shape[0]
    b_pad = _round_up(B, 16)
    tb = min(_round_up(block_b, 16), b_pad)   # batch tile, multiple of 16
    # Keep >=2 grid steps for non-tiny batches so ("parallel",) can shard across the two
    # v7x TensorCores (harmless on v5e/v6e's single TC).
    if b_pad >= 512:
        tb = min(tb, _round_up(_cdiv(b_pad, 2), 16))
    b_pad = _round_up(b_pad, tb)

    xa, xc = x_actor, x_critic                # f32 in HBM; cast to bf16 inside the kernel
    if b_pad != B:
        xa = jnp.pad(xa, ((0, b_pad - B), (0, 0)))
        xc = jnp.pad(xc, ((0, b_pad - B), (0, 0)))

    grid = (b_pad // tb,)
    tile = lambda feat: pl.BlockSpec((tb, feat), lambda i: (i, 0))
    const = lambda p: pl.BlockSpec(p.shape, lambda i: (0, 0))   # weights stay VMEM-resident

    out_shapes = (
        jax.ShapeDtypeStruct((b_pad, N_GROUPS), jnp.int32),     # action (B, 3)
        jax.ShapeDtypeStruct((b_pad, 3), jnp.float32),          # [logprob, entropy, value]
    )
    cdt = jnp.bfloat16 if bf16_tanh else jnp.float32
    kernel = functools.partial(_agent_kernel, compute_dtype=cdt)

    action, aux = pl.pallas_call(
        kernel,
        grid=grid,
        in_specs=[tile(ACTOR_IN), tile(CRITIC_IN)] + [const(p) for p in params],
        out_specs=(pl.BlockSpec((tb, N_GROUPS), lambda i: (i, 0)),
                   pl.BlockSpec((tb, 3), lambda i: (i, 0))),
        out_shape=out_shapes,
        compiler_params=pltpu.CompilerParams(
            dimension_semantics=("parallel",),
            # ~0.3 MiB weights + a few (tb,256) intermediates; 48 MiB gives headroom on all
            # gens and stays under v7x's 64 MiB physical VMEM per TensorCore.
            vmem_limit_bytes=48 * 1024 * 1024),
    )(xa, xc, *params)

    action = action[:B]
    aux = aux[:B]
    return action, aux[:, 0], aux[:, 1], aux[:, 2:3]


def agent_forward(x_actor, x_critic, params, block_b=2048, bf16_tanh=None):
    """Matches Agent.forward with action=None for 2D (B, feat) or 3D (T, N, feat) inputs."""
    if bf16_tanh is None:
        bf16_tanh = _default_bf16_tanh()
    if x_actor.ndim == 3:
        T, N, _ = x_actor.shape
        a, lp, ent, v = _agent_forward_2d(
            x_actor.reshape(T * N, ACTOR_IN),
            x_critic.reshape(T * N, CRITIC_IN),
            params, block_b=block_b, bf16_tanh=bf16_tanh)
        return (a.reshape(T, N, N_GROUPS), lp.reshape(T, N), ent.reshape(T, N),
                v.reshape(T, N, 1))
    # TODO(synk): externally-supplied `action` path (gather log_prob at given indices) not
    # wired up; only the action=None (argmax) branch of forward is implemented.
    return _agent_forward_2d(x_actor, x_critic, params, block_b=block_b, bf16_tanh=bf16_tanh)


def _reference_forward(x_actor, x_critic, params, bf16_tanh=False):
    """Pure-JAX reference using the *unfused* actor/critic math (validates the block-diag
    fusion) with the same bf16 weights / f32 accumulation / tanh precision as the kernel."""
    w1a, w1c, b1, w2, b2, w3, b3, w4, b4 = params
    H, A = HIDDEN, N_LOGITS
    f32 = jnp.float32
    cdt = jnp.bfloat16 if bf16_tanh else jnp.float32

    def dot(a, m):
        return jnp.dot(a.astype(m.dtype), m, preferred_element_type=f32)

    def act(x):
        return jnp.tanh(x.astype(cdt))

    # actor
    h = act(dot(x_actor, w1a[:, :H]) + b1[:, :H])
    h = act(dot(h, w2[:H, :H]) + b2[:, :H])
    h = act(dot(h, w3[:H, :H]) + b3[:, :H])
    logits = (dot(h, w4[:H, :A]) + b4[:, :A]).reshape(-1, N_GROUPS, N_CLASSES)
    action = jnp.argmax(logits, axis=-1).astype(jnp.int32)
    logp = jax.nn.log_softmax(logits.astype(f32), axis=-1)
    p = jnp.exp(logp)
    lp_taken = jnp.take_along_axis(logp, action[..., None], axis=-1)[..., 0].sum(-1)
    entropy = (-jnp.sum(p * logp, axis=-1)).sum(-1)
    # critic
    c = act(dot(x_critic, w1c[:, H:]) + b1[:, H:])
    c = act(dot(c, w2[H:, H:]) + b2[:, H:])
    c = act(dot(c, w3[H:, H:]) + b3[:, H:])
    value = dot(c, w4[H:, A:]) + b4[:, A:]
    return action, lp_taken, entropy, value


if __name__ == "__main__":
    key = jax.random.PRNGKey(0)
    k_p, k_a, k_c = jax.random.split(key, 3)
    params = _make_params(k_p)

    # --- 2D path: small tile -> padding + 3-step grid; f32 tanh for exact argmax parity ---
    B = 40
    xa = jax.random.normal(k_a, (B, ACTOR_IN), jnp.float32)
    xc = jax.random.normal(k_c, (B, CRITIC_IN), jnp.float32)
    out = agent_forward(xa, xc, params, block_b=16, bf16_tanh=False)
    jax.block_until_ready(out)
    action, logprob, entropy, value = out

    ra, rlp, rent, rv = _reference_forward(xa, xc, params, bf16_tanh=False)
    assert action.shape == (B, N_GROUPS) and value.shape == (B, 1)
    assert jnp.array_equal(action, ra)
    assert jnp.allclose(logprob, rlp, atol=1e-3, rtol=1e-3)
    # entropy uses the approximate EUP reciprocal -> slightly looser tolerance
    assert jnp.allclose(entropy, rent, atol=1e-2, rtol=1e-2)
    assert jnp.allclose(value, rv, atol=1e-3, rtol=1e-3)

    # --- 3D path (T, N, feat), default tile, auto precision (bf16 tanh on v6e/v7x) ---
    T, N = 4, 16
    auto_bf16 = _default_bf16_tanh()
    k_a2, k_c2 = jax.random.split(k_a)
    xa3 = jax.random.normal(k_a2, (T, N, ACTOR_IN), jnp.float32)
    xc3 = jax.random.normal(k_c2, (T, N, CRITIC_IN), jnp.float32)
    a3, lp3, ent3, v3 = agent_forward(xa3, xc3, params)
    jax.block_until_ready((a3, lp3, ent3, v3))
    assert a3.shape == (T, N, N_GROUPS) and lp3.shape == (T, N) and v3.shape == (T, N, 1)
    assert bool(jnp.all((a3 >= 0) & (a3 < N_CLASSES)))

    ra3, rlp3, rent3, rv3 = _reference_forward(
        xa3.reshape(-1, ACTOR_IN), xc3.reshape(-1, CRITIC_IN), params, bf16_tanh=auto_bf16)
    tol = 3e-2 if auto_bf16 else 1e-2
    if not auto_bf16:
        # Exact argmax parity is only meaningful when kernel & reference share f32 tanh;
        # in bf16 mode EUP-vs-XLA tanh ulp differences can flip near-tie argmax decisions.
        assert jnp.array_equal(a3.reshape(-1, N_GROUPS), ra3)
    assert jnp.allclose(lp3.reshape(-1), rlp3, atol=tol, rtol=tol)
    assert jnp.allclose(ent3.reshape(-1), rent3, atol=tol, rtol=tol)
    assert jnp.allclose(v3.reshape(-1, 1), rv3, atol=tol, rtol=tol)

    print("KERNEL_OK")
</pallas_src>

<mosaic_0001>
module attributes {stable_mosaic.version = 11 : i64} {
  func.func @_agent_kernel(%arg0: i32, %arg1: memref<16x8xf32, #tpu.memory_space<vmem>>, %arg2: memref<16x16xf32, #tpu.memory_space<vmem>>, %arg3: memref<8x256xbf16, #tpu.memory_space<vmem>>, %arg4: memref<16x256xbf16, #tpu.memory_space<vmem>>, %arg5: memref<1x256xf32, #tpu.memory_space<vmem>>, %arg6: memref<256x256xbf16, #tpu.memory_space<vmem>>, %arg7: memref<1x256xf32, #tpu.memory_space<vmem>>, %arg8: memref<256x256xbf16, #tpu.memory_space<vmem>>, %arg9: memref<1x256xf32, #tpu.memory_space<vmem>>, %arg10: memref<256x16xbf16, #tpu.memory_space<vmem>>, %arg11: memref<1x16xf32, #tpu.memory_space<vmem>>, %arg12: memref<16x3xi32, #tpu.memory_space<vmem>>, %arg13: memref<16x3xf32, #tpu.memory_space<vmem>>) attributes {dimension_semantics = [#tpu.dimension_semantics<parallel>], iteration_bounds = array<i64: 3>, scalar_prefetch = 0 : i64, scratch_operands = 0 : i64, tpu.core_type = #tpu.core_type<tc>, window_params = [{transform_indices = @transform_0, window_bounds = array<i64: 16, 8>}, {transform_indices = @transform_1, window_bounds = array<i64: 16, 16>}, {pipeline_mode = #tpu.pipeline_mode<synchronous>, transform_indices = @transform_2, window_bounds = array<i64: 8, 256>}, {pipeline_mode = #tpu.pipeline_mode<synchronous>, transform_indices = @transform_3, window_bounds = array<i64: 16, 256>}, {pipeline_mode = #tpu.pipeline_mode<synchronous>, transform_indices = @transform_4, window_bounds = array<i64: 1, 256>}, {pipeline_mode = #tpu.pipeline_mode<synchronous>, transform_indices = @transform_5, window_bounds = array<i64: 256, 256>}, {pipeline_mode = #tpu.pipeline_mode<synchronous>, transform_indices = @transform_6, window_bounds = array<i64: 1, 256>}, {pipeline_mode = #tpu.pipeline_mode<synchronous>, transform_indices = @transform_7, window_bounds = array<i64: 256, 256>}, {pipeline_mode = #tpu.pipeline_mode<synchronous>, transform_indices = @transform_8, window_bounds = array<i64: 1, 256>}, {pipeline_mode = #tpu.pipeline_mode<synchronous>, transform_indices = @transform_9, window_bounds = array<i64: 256, 16>}, {pipeline_mode = #tpu.pipeline_mode<synchronous>, transform_indices = @transform_10, window_bounds = array<i64: 1, 16>}, {transform_indices = @transform_11, window_bounds = array<i64: 16, 3>}, {transform_indices = @transform_12, window_bounds = array<i64: 16, 3>}]} {
    %c0 = arith.constant 0 : index
    %c0_0 = arith.constant 0 : index
    %0 = vector.load %arg1[%c0, %c0_0] : memref<16x8xf32, #tpu.memory_space<vmem>>, vector<16x8xf32>
    %1 = arith.truncf %0 : vector<16x8xf32> to vector<16x8xbf16>
    %c0_1 = arith.constant 0 : index
    %c0_2 = arith.constant 0 : index
    %2 = vector.load %arg3[%c0_1, %c0_2] : memref<8x256xbf16, #tpu.memory_space<vmem>>, vector<8x256xbf16>
    %cst = arith.constant dense<0.000000e+00> : vector<16x256xf32>
    %3 = tpu.matmul %1, %2, %cst {dimension_numbers = #tpu.dot_dimension_numbers<[1], [0], [0], [1], [0, 0, 1, 1], [], []>} : vector<16x8xbf16>, vector<8x256xbf16>, vector<16x256xf32> -> vector<16x256xf32>
    %c0_3 = arith.constant 0 : index
    %c0_4 = arith.constant 0 : index
    %4 = vector.load %arg2[%c0_3, %c0_4] : memref<16x16xf32, #tpu.memory_space<vmem>>, vector<16x16xf32>
    %5 = arith.truncf %4 : vector<16x16xf32> to vector<16x16xbf16>
    %c0_5 = arith.constant 0 : index
    %c0_6 = arith.constant 0 : index
    %6 = vector.load %arg4[%c0_5, %c0_6] : memref<16x256xbf16, #tpu.memory_space<vmem>>, vector<16x256xbf16>
    %cst_7 = arith.constant dense<0.000000e+00> : vector<16x256xf32>
    %7 = tpu.matmul %5, %6, %cst_7 {dimension_numbers = #tpu.dot_dimension_numbers<[1], [0], [0], [1], [0, 0, 1, 1], [], []>} : vector<16x16xbf16>, vector<16x256xbf16>, vector<16x256xf32> -> vector<16x256xf32>
    %8 = arith.addf %3, %7 : vector<16x256xf32>
    %c0_8 = arith.constant 0 : index
    %c0_9 = arith.constant 0 : index
    %9 = vector.load %arg5[%c0_8, %c0_9] : memref<1x256xf32, #tpu.memory_space<vmem>>, vector<1x256xf32>
    %10 = vector.broadcast %9 : vector<1x256xf32> to vector<16x256xf32>
    %11 = arith.addf %8, %10 : vector<16x256xf32>
    %12 = math.tanh %11 : vector<16x256xf32>
    %13 = arith.truncf %12 : vector<16x256xf32> to vector<16x256xbf16>
    %c0_10 = arith.constant 0 : index
    %c0_11 = arith.constant 0 : index
    %14 = vector.load %arg6[%c0_10, %c0_11] : memref<256x256xbf16, #tpu.memory_space<vmem>>, vector<256x256xbf16>
    %cst_12 = arith.constant dense<0.000000e+00> : vector<16x256xf32>
    %15 = tpu.matmul %13, %14, %cst_12 {dimension_numbers = #tpu.dot_dimension_numbers<[1], [0], [0], [1], [0, 0, 1, 1], [], []>} : vector<16x256xbf16>, vector<256x256xbf16>, vector<16x256xf32> -> vector<16x256xf32>
    %c0_13 = arith.constant 0 : index
    %c0_14 = arith.constant 0 : index
    %16 = vector.load %arg7[%c0_13, %c0_14] : memref<1x256xf32, #tpu.memory_space<vmem>>, vector<1x256xf32>
    %17 = vector.broadcast %16 : vector<1x256xf32> to vector<16x256xf32>
    %18 = arith.addf %15, %17 : vector<16x256xf32>
    %19 = math.tanh %18 : vector<16x256xf32>
    %20 = arith.truncf %19 : vector<16x256xf32> to vector<16x256xbf16>
    %c0_15 = arith.constant 0 : index
    %c0_16 = arith.constant 0 : index
    %21 = vector.load %arg8[%c0_15, %c0_16] : memref<256x256xbf16, #tpu.memory_space<vmem>>, vector<256x256xbf16>
    %cst_17 = arith.constant dense<0.000000e+00> : vector<16x256xf32>
    %22 = tpu.matmul %20, %21, %cst_17 {dimension_numbers = #tpu.dot_dimension_numbers<[1], [0], [0], [1], [0, 0, 1, 1], [], []>} : vector<16x256xbf16>, vector<256x256xbf16>, vector<16x256xf32> -> vector<16x256xf32>
    %c0_18 = arith.constant 0 : index
    %c0_19 = arith.constant 0 : index
    %23 = vector.load %arg9[%c0_18, %c0_19] : memref<1x256xf32, #tpu.memory_space<vmem>>, vector<1x256xf32>
    %24 = vector.broadcast %23 : vector<1x256xf32> to vector<16x256xf32>
    %25 = arith.addf %22, %24 : vector<16x256xf32>
    %26 = math.tanh %25 : vector<16x256xf32>
    %27 = arith.truncf %26 : vector<16x256xf32> to vector<16x256xbf16>
    %c0_20 = arith.constant 0 : index
    %c0_21 = arith.constant 0 : index
    %28 = vector.load %arg10[%c0_20, %c0_21] : memref<256x16xbf16, #tpu.memory_space<vmem>>, vector<256x16xbf16>
    %cst_22 = arith.constant dense<0.000000e+00> : vector<16x16xf32>
    %29 = tpu.matmul %27, %28, %cst_22 {dimension_numbers = #tpu.dot_dimension_numbers<[1], [0], [0], [1], [0, 0, 1, 1], [], []>} : vector<16x256xbf16>, vector<256x16xbf16>, vector<16x16xf32> -> vector<16x16xf32>
    %c0_23 = arith.constant 0 : index
    %c0_24 = arith.constant 0 : index
    %30 = vector.load %arg11[%c0_23, %c0_24] : memref<1x16xf32, #tpu.memory_space<vmem>>, vector<1x16xf32>
    %31 = vector.broadcast %30 : vector<1x16xf32> to vector<16x16xf32>
    %32 = arith.addf %29, %31 : vector<16x16xf32>
    %33 = vector.extract_strided_slice %32 {offsets = [0, 0], sizes = [16, 15], strides = [1, 1]} : vector<16x16xf32> to vector<16x15xf32>
    %34 = vector.extract_strided_slice %32 {offsets = [0, 15], sizes = [16, 1], strides = [1, 1]} : vector<16x16xf32> to vector<16x1xf32>
    %35 = tpu.iota {dimensions = array<i32: 1>} : vector<16x15xi32>
    %c0_i32 = arith.constant 0 : i32
    %36 = vector.broadcast %c0_i32 : i32 to vector<16x15xi32>
    %37 = arith.cmpi sge, %35, %36 : vector<16x15xi32>
    %c5_i32 = arith.constant 5 : i32
    %38 = vector.broadcast %c5_i32 : i32 to vector<16x15xi32>
    %39 = arith.cmpi slt, %35, %38 : vector<16x15xi32>
    %40 = arith.andi %37, %39 : vector<16x15xi1>
    %c5_i32_25 = arith.constant 5 : i32
    %41 = vector.broadcast %c5_i32_25 : i32 to vector<16x15xi32>
    %42 = arith.cmpi sge, %35, %41 : vector<16x15xi32>
    %c10_i32 = arith.constant 10 : i32
    %43 = vector.broadcast %c10_i32 : i32 to vector<16x15xi32>
    %44 = arith.cmpi slt, %35, %43 : vector<16x15xi32>
    %45 = arith.andi %42, %44 : vector<16x15xi1>
    %c10_i32_26 = arith.constant 10 : i32
    %46 = vector.broadcast %c10_i32_26 : i32 to vector<16x15xi32>
    %47 = arith.cmpi sge, %35, %46 : vector<16x15xi32>
    %c15_i32 = arith.constant 15 : i32
    %48 = vector.broadcast %c15_i32 : i32 to vector<16x15xi32>
    %49 = arith.cmpi slt, %35, %48 : vector<16x15xi32>
    %50 = arith.andi %47, %49 : vector<16x15xi1>
    %cst_27 = arith.constant -1.000000e+30 : f32
    %51 = vector.broadcast %cst_27 : f32 to vector<16x15xf32>
    %52 = arith.select %40, %33, %51 : vector<16x15xi1>, vector<16x15xf32>
    %cst_28 = arith.constant dense<0xFF800000> : vector<16xf32>
    %53 = vector.multi_reduction <maximumf>, %52, %cst_28 [1] : vector<16x15xf32> to vector<16xf32>
    %54 = vector.shape_cast %53 : vector<16xf32> to vector<16x1xf32>
    %cst_29 = arith.constant -1.000000e+30 : f32
    %55 = vector.broadcast %cst_29 : f32 to vector<16x15xf32>
    %56 = arith.select %45, %33, %55 : vector<16x15xi1>, vector<16x15xf32>
    %cst_30 = arith.constant dense<0xFF800000> : vector<16xf32>
    %57 = vector.multi_reduction <maximumf>, %56, %cst_30 [1] : vector<16x15xf32> to vector<16xf32>
    %58 = vector.shape_cast %57 : vector<16xf32> to vector<16x1xf32>
    %cst_31 = arith.constant -1.000000e+30 : f32
    %59 = vector.broadcast %cst_31 : f32 to vector<16x15xf32>
    %60 = arith.select %50, %33, %59 : vector<16x15xi1>, vector<16x15xf32>
    %cst_32 = arith.constant dense<0xFF800000> : vector<16xf32>
    %61 = vector.multi_reduction <maximumf>, %60, %cst_32 [1] : vector<16x15xf32> to vector<16xf32>
    %62 = vector.shape_cast %61 : vector<16xf32> to vector<16x1xf32>
    %63 = vector.shape_cast %58 : vector<16x1xf32> to vector<16x1xf32>
    %64 = vector.broadcast %63 : vector<16x1xf32> to vector<16x15xf32>
    %65 = vector.shape_cast %62 : vector<16x1xf32> to vector<16x1xf32>
    %66 = vector.broadcast %65 : vector<16x1xf32> to vector<16x15xf32>
    %67 = arith.select %45, %64, %66 : vector<16x15xi1>, vector<16x15xf32>
    %68 = vector.shape_cast %54 : vector<16x1xf32> to vector<16x1xf32>
    %69 = vector.broadcast %68 : vector<16x1xf32> to vector<16x15xf32>
    %70 = arith.select %40, %69, %67 : vector<16x15xi1>, vector<16x15xf32>
    %71 = arith.subf %33, %70 : vector<16x15xf32>
    %72 = math.exp %71 : vector<16x15xf32>
    %73 = arith.mulf %72, %71 : vector<16x15xf32>
    %cst_33 = arith.constant 0.000000e+00 : f32
    %74 = vector.broadcast %cst_33 : f32 to vector<16x15xf32>
    %75 = arith.select %40, %72, %74 : vector<16x15xi1>, vector<16x15xf32>
    %cst_34 = arith.constant dense<0.000000e+00> : vector<16xf32>
    %76 = vector.multi_reduction <add>, %75, %cst_34 [1] : vector<16x15xf32> to vector<16xf32>
    %77 = vector.shape_cast %76 : vector<16xf32> to vector<16x1xf32>
    %cst_35 = arith.constant 0.000000e+00 : f32
    %78 = vector.broadcast %cst_35 : f32 to vector<16x15xf32>
    %79 = arith.select %45, %72, %78 : vector<16x15xi1>, vector<16x15xf32>
    %cst_36 = arith.constant dense<0.000000e+00> : vector<16xf32>
    %80 = vector.multi_reduction <add>, %79, %cst_36 [1] : vector<16x15xf32> to vector<16xf32>
    %81 = vector.shape_cast %80 : vector<16xf32> to vector<16x1xf32>
    %cst_37 = arith.constant 0.000000e+00 : f32
    %82 = vector.broadcast %cst_37 : f32 to vector<16x15xf32>
    %83 = arith.select %50, %72, %82 : vector<16x15xi1>, vector<16x15xf32>
    %cst_38 = arith.constant dense<0.000000e+00> : vector<16xf32>
    %84 = vector.multi_reduction <add>, %83, %cst_38 [1] : vector<16x15xf32> to vector<16xf32>
    %85 = vector.shape_cast %84 : vector<16xf32> to vector<16x1xf32>
    %86 = tpu.concatenate %77, %81, %85 in 1 : vector<16x1xf32>, vector<16x1xf32>, vector<16x1xf32> -> vector<16x3xf32>
    %cst_39 = arith.constant 0.000000e+00 : f32
    %87 = vector.broadcast %cst_39 : f32 to vector<16x15xf32>
    %88 = arith.select %40, %73, %87 : vector<16x15xi1>, vector<16x15xf32>
    %cst_40 = arith.constant dense<0.000000e+00> : vector<16xf32>
    %89 = vector.multi_reduction <add>, %88, %cst_40 [1] : vector<16x15xf32> to vector<16xf32>
    %90 = vector.shape_cast %89 : vector<16xf32> to vector<16x1xf32>
    %cst_41 = arith.constant 0.000000e+00 : f32
    %91 = vector.broadcast %cst_41 : f32 to vector<16x15xf32>
    %92 = arith.select %45, %73, %91 : vector<16x15xi1>, vector<16x15xf32>
    %cst_42 = arith.constant dense<0.000000e+00> : vector<16xf32>
    %93 = vector.multi_reduction <add>, %92, %cst_42 [1] : vector<16x15xf32> to vector<16xf32>
    %94 = vector.shape_cast %93 : vector<16xf32> to vector<16x1xf32>
    %cst_43 = arith.constant 0.000000e+00 : f32
    %95 = vector.broadcast %cst_43 : f32 to vector<16x15xf32>
    %96 = arith.select %50, %73, %95 : vector<16x15xi1>, vector<16x15xf32>
    %cst_44 = arith.constant dense<0.000000e+00> : vector<16xf32>
    %97 = vector.multi_reduction <add>, %96, %cst_44 [1] : vector<16x15xf32> to vector<16xf32>
    %98 = vector.shape_cast %97 : vector<16xf32> to vector<16x1xf32>
    %99 = tpu.concatenate %90, %94, %98 in 1 : vector<16x1xf32>, vector<16x1xf32>, vector<16x1xf32> -> vector<16x3xf32>
    %100 = math.log %86 : vector<16x3xf32>
    %101 = tpu.reciprocal %86 {approx = true} : vector<16x3xf32> -> vector<16x3xf32>
    %cst_45 = arith.constant dense<0.000000e+00> : vector<16xf32>
    %102 = vector.multi_reduction <add>, %100, %cst_45 [1] : vector<16x3xf32> to vector<16xf32>
    %103 = vector.shape_cast %102 : vector<16xf32> to vector<16x1xf32>
    %cst_46 = arith.constant 0.000000e+00 : f32
    %104 = vector.broadcast %cst_46 : f32 to vector<16x1xf32>
    %105 = arith.subf %104, %103 : vector<16x1xf32>
    %106 = arith.mulf %99, %101 : vector<16x3xf32>
    %107 = arith.subf %100, %106 : vector<16x3xf32>
    %cst_47 = arith.constant dense<0.000000e+00> : vector<16xf32>
    %108 = vector.multi_reduction <add>, %107, %cst_47 [1] : vector<16x3xf32> to vector<16xf32>
    %109 = vector.shape_cast %108 : vector<16xf32> to vector<16x1xf32>
    %110 = arith.cmpf oeq, %33, %70 : vector<16x15xf32>
    %111 = arith.andi %110, %40 : vector<16x15xi1>
    %c0_i32_48 = arith.constant 0 : i32
    %112 = vector.broadcast %c0_i32_48 : i32 to vector<16x15xi32>
    %113 = arith.subi %35, %112 : vector<16x15xi32>
    %c5_i32_49 = arith.constant 5 : i32
    %114 = vector.broadcast %c5_i32_49 : i32 to vector<16x15xi32>
    %115 = arith.select %111, %113, %114 : vector<16x15xi1>, vector<16x15xi32>
    %cst_50 = arith.constant dense<2147483647> : vector<16xi32>
    %116 = vector.multi_reduction <minsi>, %115, %cst_50 [1] : vector<16x15xi32> to vector<16xi32>
    %117 = vector.shape_cast %116 : vector<16xi32> to vector<16x1xi32>
    %118 = arith.andi %110, %45 : vector<16x15xi1>
    %c5_i32_51 = arith.constant 5 : i32
    %119 = vector.broadcast %c5_i32_51 : i32 to vector<16x15xi32>
    %120 = arith.subi %35, %119 : vector<16x15xi32>
    %c5_i32_52 = arith.constant 5 : i32
    %121 = vector.broadcast %c5_i32_52 : i32 to vector<16x15xi32>
    %122 = arith.select %118, %120, %121 : vector<16x15xi1>, vector<16x15xi32>
    %cst_53 = arith.constant dense<2147483647> : vector<16xi32>
    %123 = vector.multi_reduction <minsi>, %122, %cst_53 [1] : vector<16x15xi32> to vector<16xi32>
    %124 = vector.shape_cast %123 : vector<16xi32> to vector<16x1xi32>
    %125 = arith.andi %110, %50 : vector<16x15xi1>
    %c10_i32_54 = arith.constant 10 : i32
    %126 = vector.broadcast %c10_i32_54 : i32 to vector<16x15xi32>
    %127 = arith.subi %35, %126 : vector<16x15xi32>
    %c5_i32_55 = arith.constant 5 : i32
    %128 = vector.broadcast %c5_i32_55 : i32 to vector<16x15xi32>
    %129 = arith.select %125, %127, %128 : vector<16x15xi1>, vector<16x15xi32>
    %cst_56 = arith.constant dense<2147483647> : vector<16xi32>
    %130 = vector.multi_reduction <minsi>, %129, %cst_56 [1] : vector<16x15xi32> to vector<16xi32>
    %131 = vector.shape_cast %130 : vector<16xi32> to vector<16x1xi32>
    %132 = tpu.concatenate %117, %124, %131 in 1 : vector<16x1xi32>, vector<16x1xi32>, vector<16x1xi32> -> vector<16x3xi32>
    %c0_57 = arith.constant 0 : index
    %c0_58 = arith.constant 0 : index
    %133 = vector.load %arg12[%c0_57, %c0_58] : memref<16x3xi32, #tpu.memory_space<vmem>>, vector<16x3xi32>
    tpu.vector_store %arg12[%c0_57, %c0_58], %132 {strides = array<i32>} : memref<16x3xi32, #tpu.memory_space<vmem>>, vector<16x3xi32>,
    %134 = tpu.iota {dimensions = array<i32: 1>} : vector<16x3xi32>
    %c0_i32_59 = arith.constant 0 : i32
    %135 = vector.broadcast %c0_i32_59 : i32 to vector<16x3xi32>
    %136 = arith.cmpi eq, %134, %135 : vector<16x3xi32>
    %c1_i32 = arith.constant 1 : i32
    %137 = vector.broadcast %c1_i32 : i32 to vector<16x3xi32>
    %138 = arith.cmpi eq, %134, %137 : vector<16x3xi32>
    %139 = vector.shape_cast %109 : vector<16x1xf32> to vector<16x1xf32>
    %140 = vector.broadcast %139 : vector<16x1xf32> to vector<16x3xf32>
    %141 = vector.shape_cast %34 : vector<16x1xf32> to vector<16x1xf32>
    %142 = vector.broadcast %141 : vector<16x1xf32> to vector<16x3xf32>
    %143 = arith.select %138, %140, %142 : vector<16x3xi1>, vector<16x3xf32>
    %144 = vector.shape_cast %105 : vector<16x1xf32> to vector<16x1xf32>
    %145 = vector.broadcast %144 : vector<16x1xf32> to vector<16x3xf32>
    %146 = arith.select %136, %145, %143 : vector<16x3xi1>, vector<16x3xf32>
    %c0_60 = arith.constant 0 : index
    %c0_61 = arith.constant 0 : index
    %147 = vector.load %arg13[%c0_60, %c0_61] : memref<16x3xf32, #tpu.memory_space<vmem>>, vector<16x3xf32>
    tpu.vector_store %arg13[%c0_60, %c0_61], %146 {strides = array<i32>} : memref<16x3xf32, #tpu.memory_space<vmem>>, vector<16x3xf32>,
    return
  }
  func.func @transform_0(%arg0: i32) -> (i32, i32) {
    %c0_i32 = arith.constant 0 : i32
    %c0_i32_0 = arith.constant 0 : i32
    return %arg0, %c0_i32 : i32, i32
  }
  func.func @transform_1(%arg0: i32) -> (i32, i32) {
    %c0_i32 = arith.constant 0 : i32
    %c0_i32_0 = arith.constant 0 : i32
    return %arg0, %c0_i32 : i32, i32
  }
  func.func @transform_2(%arg0: i32) -> (i32, i32) {
    %c0_i32 = arith.constant 0 : i32
    %c0_i32_0 = arith.constant 0 : i32
    %c0_i32_1 = arith.constant 0 : i32
    return %c0_i32, %c0_i32_0 : i32, i32
  }
  func.func @transform_3(%arg0: i32) -> (i32, i32) {
    %c0_i32 = arith.constant 0 : i32
    %c0_i32_0 = arith.constant 0 : i32
    %c0_i32_1 = arith.constant 0 : i32
    return %c0_i32, %c0_i32_0 : i32, i32
  }
  func.func @transform_4(%arg0: i32) -> (i32, i32) {
    %c0_i32 = arith.constant 0 : i32
    %c0_i32_0 = arith.constant 0 : i32
    %c0_i32_1 = arith.constant 0 : i32
    return %c0_i32, %c0_i32_0 : i32, i32
  }
  func.func @transform_5(%arg0: i32) -> (i32, i32) {
    %c0_i32 = arith.constant 0 : i32
    %c0_i32_0 = arith.constant 0 : i32
    %c0_i32_1 = arith.constant 0 : i32
    return %c0_i32, %c0_i32_0 : i32, i32
  }
  func.func @transform_6(%arg0: i32) -> (i32, i32) {
    %c0_i32 = arith.constant 0 : i32
    %c0_i32_0 = arith.constant 0 : i32
    %c0_i32_1 = arith.constant 0 : i32
    return %c0_i32, %c0_i32_0 : i32, i32
  }
  func.func @transform_7(%arg0: i32) -> (i32, i32) {
    %c0_i32 = arith.constant 0 : i32
    %c0_i32_0 = arith.constant 0 : i32
    %c0_i32_1 = arith.constant 0 : i32
    return %c0_i32, %c0_i32_0 : i32, i32
  }
  func.func @transform_8(%arg0: i32) -> (i32, i32) {
    %c0_i32 = arith.constant 0 : i32
    %c0_i32_0 = arith.constant 0 : i32
    %c0_i32_1 = arith.constant 0 : i32
    return %c0_i32, %c0_i32_0 : i32, i32
  }
  func.func @transform_9(%arg0: i32) -> (i32, i32) {
    %c0_i32 = arith.constant 0 : i32
    %c0_i32_0 = arith.constant 0 : i32
    %c0_i32_1 = arith.constant 0 : i32
    return %c0_i32, %c0_i32_0 : i32, i32
  }
  func.func @transform_10(%arg0: i32) -> (i32, i32) {
    %c0_i32 = arith.constant 0 : i32
    %c0_i32_0 = arith.constant 0 : i32
    %c0_i32_1 = arith.constant 0 : i32
    return %c0_i32, %c0_i32_0 : i32, i32
  }
  func.func @transform_11(%arg0: i32) -> (i32, i32) {
    %c0_i32 = arith.constant 0 : i32
    %c0_i32_0 = arith.constant 0 : i32
    return %arg0, %c0_i32 : i32, i32
  }
  func.func @transform_12(%arg0: i32) -> (i32, i32) {
    %c0_i32 = arith.constant 0 : i32
    %c0_i32_0 = arith.constant 0 : i32
    return %arg0, %c0_i32 : i32, i32
  }
}

</mosaic_0001>

<llo_original>
// kernel: _agent_forward_2d.1
$region0: #{_agent_forward_2d.1}
  #allocation0 [shape = 'u32[]', space=smem, size = 0x4, offset = 0x4, fixed_abs, tag = 'smem constant byte address 0x4 - core index']
  #allocation1 [shape = 'u32[144,128]{1,0:T(1,128)}', space=vmem, size = 0x12000, scoped, tag = 'internal scratch']
  %s0 = inlined_call_operand.vmem [shape: f32[48,8], index: 0, kind: input, shape index: {}]
  %s1 = inlined_call_operand.vmem [shape: f32[48,16], index: 1, kind: input, shape index: {}]
  %s2 = inlined_call_operand.vmem [shape: bf16[8,256], index: 2, kind: input, shape index: {}]
  %s3 = inlined_call_operand.vmem [shape: bf16[16,256], index: 3, kind: input, shape index: {}]
  %s4 = inlined_call_operand.vmem [shape: f32[1,256], index: 4, kind: input, shape index: {}]
  %s5 = inlined_call_operand.vmem [shape: bf16[256,256], index: 5, kind: input, shape index: {}]
  %s6 = inlined_call_operand.vmem [shape: f32[1,256], index: 6, kind: input, shape index: {}]
  %s7 = inlined_call_operand.hbm [shape: bf16[256,256], index: 7, kind: input, shape index: {}]
  %s8 = inlined_call_operand.vmem [shape: f32[1,256], index: 8, kind: input, shape index: {}]
  %s9 = inlined_call_operand.vmem [shape: bf16[256,16], index: 9, kind: input, shape index: {}]
  %s10 = inlined_call_operand.vmem [shape: f32[1,16], index: 10, kind: input, shape index: {}]
  %s11 = inlined_call_operand.vmem [shape: s32[48,3], index: 11, kind: output, shape index: {0}]
  %s12 = inlined_call_operand.vmem [shape: f32[48,3], index: 12, kind: output, shape index: {1}]
  %13 = xla_tuple %s11, %s12
  %s14 = sld [smem:[#allocation0]]
  $region89: #{_agent_forward_2d.1} parent=0
    _
  %s16 = ssub.s32 1, %s14
  %s17 = scalar_select 0, %s16, %s14
  $region1: #{_agent_forward_2d.1} parent=0
    #allocation2 [shape = 'u8[131072]{0}', space=vmem, size = 0x20000, scoped, tag = 'input window, operand 7, single buffered']
    #allocation3 [shape = 's32[2]{0}', space=sflag, size = 0x8, scoped, tag = 'scoped memory for _agent_forward_2d.1']
    %18 = vsyncpa [#allocation3], 0
    loop: start=0, step=1, limit=5
    $region2: #{_agent_forward_2d.1} parent=1 // loop_pre_header
      _
    $region3: #{_agent_forward_2d.1} parent=1 // loop_header
      %s20 = sphi 0, %s24
      %p21 = scmp.ge.s32.totalorder %s20, 5
      %s30 = sphi 0, %s32
      %s33 = sphi 0, %s30
      %s34 = sphi 0, %s33
      %s50 = sphi 0, %s34
      %s56 = sphi 0, %s58
      %s59 = sphi 0, %s56
      %s60 = sphi 0, %s59
      %s76 = sphi 0, %s60
      %s80 = sphi 0, %s80
      %s82 = sphi 0, %s80
      %s83 = sphi 0, %s82
      %s97 = sphi 0, %s83
      %s101 = sphi 0, %s101
      %s103 = sphi 0, %s101
      %s104 = sphi 0, %s103
      %s118 = sphi 0, %s104
      %s122 = sphi 0, %s122
      %s124 = sphi 0, %s122
      %s125 = sphi 0, %s124
      %s139 = sphi 0, %s125
      %s143 = sphi 0, %s143
      %s145 = sphi 0, %s143
      %s146 = sphi 0, %s145
      %s160 = sphi 0, %s146
      %s164 = sphi 0, %s164
      %s166 = sphi 0, %s164
      %s167 = sphi 0, %s166
      %s181 = sphi 0, %s167
      %s185 = sphi 0, %s185
      %s187 = sphi 0, %s185
      %s188 = sphi 0, %s187
      %s202 = sphi 0, %s188
      %s206 = sphi 0, %s206
      %s208 = sphi 0, %s206
      %s209 = sphi 0, %s208
      %s223 = sphi 0, %s209
      %s227 = sphi 0, %s227
      %s229 = sphi 0, %s227
      %s230 = sphi 0, %s229
      %s244 = sphi 0, %s230
      %s248 = sphi 0, %s248
      %s250 = sphi 0, %s248
      %s251 = sphi 0, %s250
      %s265 = sphi 0, %s251
      %s271 = sphi 0, %s273
      %s274 = sphi 0, %s271
      %s275 = sphi 0, %s274
      %s291 = sphi 0, %s275
      %s297 = sphi 0, %s299
      %s300 = sphi 0, %s297
      %s301 = sphi 0, %s300
      %s317 = sphi 0, %s301
    $region4: #{_agent_forward_2d.1} parent=1 // loop_header_branch
      %23 = sbr.rel (%p21) target = $region8
    $region5: #{_agent_forward_2d.1} parent=1 // loop_body
      %s25 = ssub.s32 %s20, 1
      %s26 = ssub.s32 %s20, 2
      %s27 = sadd.s32 %s20, 1
      %s28 = ssub.s32 %s20, %s27
      %p29 = scmp.eq.s32.totalorder %s28, 0
      %s31 = sadd.s32 %s30, 1
      %s32 = scalar_select %p29, %s30, %s31
      %p35 = pneg %p29
      %p36 = scmp.eq.s32.totalorder %s20, 2
      %p37 = por %p35, %p36
      %p38 = scmp.ne.s32.totalorder %s30, %s33
      %p39 = scmp.eq.s32.totalorder %s20, 0
      %p40 = por %p38, %p39
      %p41 = scmp.ne.s32.totalorder %s30, %s33
      %p42 = scmp.eq.s32.totalorder %s25, 2
      %p43 = por %p41, %p42
      %p44 = scmp.ne.s32.totalorder %s33, %s34
      %p45 = scmp.eq.s32.totalorder %s25, 0
      %p46 = por %p44, %p45
      %p47 = scmp.ne.s32.totalorder %s33, %s34
      %p48 = scmp.eq.s32.totalorder %s26, 2
      %p49 = por %p47, %p48
      %p51 = scmp.ne.s32.totalorder %s34, %s50
      %p52 = scmp.eq.s32.totalorder %s26, 0
      %p53 = por %p51, %p52
      %s54 = ssub.s32 %s20, %s27
      %p55 = scmp.eq.s32.totalorder %s54, 0
      %s57 = sadd.s32 %s56, 1
      %s58 = scalar_select %p55, %s56, %s57
      %p61 = pneg %p55
      %p62 = scmp.eq.s32.totalorder %s20, 2
      %p63 = por %p61, %p62
      %p64 = scmp.ne.s32.totalorder %s56, %s59
      %p65 = scmp.eq.s32.totalorder %s20, 0
      %p66 = por %p64, %p65
      %p67 = scmp.ne.s32.totalorder %s56, %s59
      %p68 = scmp.eq.s32.totalorder %s25, 2
      %p69 = por %p67, %p68
      %p70 = scmp.ne.s32.totalorder %s59, %s60
      %p71 = scmp.eq.s32.totalorder %s25, 0
      %p72 = por %p70, %p71
      %p73 = scmp.ne.s32.totalorder %s59, %s60
      %p74 = scmp.eq.s32.totalorder %s26, 2
      %p75 = por %p73, %p74
      %p77 = scmp.ne.s32.totalorder %s60, %s76
      %p78 = scmp.eq.s32.totalorder %s26, 0
      %p79 = por %p77, %p78
      %s81 = sadd.s32 %s80, 1
      %p84 = scmp.eq.s32.totalorder %s20, 2
      %p85 = scmp.ne.s32.totalorder %s80, %s82
      %p86 = scmp.eq.s32.totalorder %s20, 0
      %p87 = por %p85, %p86
      %p88 = scmp.ne.s32.totalorder %s80, %s82
      %p89 = scmp.eq.s32.totalorder %s25, 2
      %p90 = por %p88, %p89
      %p91 = scmp.ne.s32.totalorder %s82, %s83
      %p92 = scmp.eq.s32.totalorder %s25, 0
      %p93 = por %p91, %p92
      %p94 = scmp.ne.s32.totalorder %s82, %s83
      %p95 = scmp.eq.s32.totalorder %s26, 2
      %p96 = por %p94, %p95
      %p98 = scmp.ne.s32.totalorder %s83, %s97
      %p99 = scmp.eq.s32.totalorder %s26, 0
      %p100 = por %p98, %p99
      %s102 = sadd.s32 %s101, 1
      %p105 = scmp.eq.s32.totalorder %s20, 2
      %p106 = scmp.ne.s32.totalorder %s101, %s103
      %p107 = scmp.eq.s32.totalorder %s20, 0
      %p108 = por %p106, %p107
      %p109 = scmp.ne.s32.totalorder %s101, %s103
      %p110 = scmp.eq.s32.totalorder %s25, 2
      %p111 = por %p109, %p110
      %p112 = scmp.ne.s32.totalorder %s103, %s104
      %p113 = scmp.eq.s32.totalorder %s25, 0
      %p114 = por %p112, %p113
      %p115 = scmp.ne.s32.totalorder %s103, %s104
      %p116 = scmp.eq.s32.totalorder %s26, 2
      %p117 = por %p115, %p116
      %p119 = scmp.ne.s32.totalorder %s104, %s118
      %p120 = scmp.eq.s32.totalorder %s26, 0
      %p121 = por %p119, %p120
      %s123 = sadd.s32 %s122, 1
      %p126 = scmp.eq.s32.totalorder %s20, 2
      %p127 = scmp.ne.s32.totalorder %s122, %s124
      %p128 = scmp.eq.s32.totalorder %s20, 0
      %p129 = por %p127, %p128
      %p130 = scmp.ne.s32.totalorder %s122, %s124
      %p131 = scmp.eq.s32.totalorder %s25, 2
      %p132 = por %p130, %p131
      %p133 = scmp.ne.s32.totalorder %s124, %s125
      %p134 = scmp.eq.s32.totalorder %s25, 0
      %p135 = por %p133, %p134
      %p136 = scmp.ne.s32.totalorder %s124, %s125
      %p137 = scmp.eq.s32.totalorder %s26, 2
      %p138 = por %p136, %p137
      %p140 = scmp.ne.s32.totalorder %s125, %s139
      %p141 = scmp.eq.s32.totalorder %s26, 0
      %p142 = por %p140, %p141
      %s144 = sadd.s32 %s143, 1
      %p147 = scmp.eq.s32.totalorder %s20, 2
      %p148 = scmp.ne.s32.totalorder %s143, %s145
      %p149 = scmp.eq.s32.totalorder %s20, 0
      %p150 = por %p148, %p149
      %p151 = scmp.ne.s32.totalorder %s143, %s145
      %p152 = scmp.eq.s32.totalorder %s25, 2
      %p153 = por %p151, %p152
      %p154 = scmp.ne.s32.totalorder %s145, %s146
      %p155 = scmp.eq.s32.totalorder %s25, 0
      %p156 = por %p154, %p155
      %p157 = scmp.ne.s32.totalorder %s145, %s146
      %p158 = scmp.eq.s32.totalorder %s26, 2
      %p159 = por %p157, %p158
      %p161 = scmp.ne.s32.totalorder %s146, %s160
      %p162 = scmp.eq.s32.totalorder %s26, 0
      %p163 = por %p161, %p162
      %s165 = sadd.s32 %s164, 1
      %p168 = scmp.eq.s32.totalorder %s20, 2
      %p169 = scmp.ne.s32.totalorder %s164, %s166
      %p170 = scmp.eq.s32.totalorder %s20, 0
      %p171 = por %p169, %p170
      %p172 = scmp.ne.s32.totalorder %s164, %s166
      %p173 = scmp.eq.s32.totalorder %s25, 2
      %p174 = por %p172, %p173
      %p175 = scmp.ne.s32.totalorder %s166, %s167
      %p176 = scmp.eq.s32.totalorder %s25, 0
      %p177 = por %p175, %p176
      %p178 = scmp.ne.s32.totalorder %s166, %s167
      %p179 = scmp.eq.s32.totalorder %s26, 2
      %p180 = por %p178, %p179
      %p182 = scmp.ne.s32.totalorder %s167, %s181
      %p183 = scmp.eq.s32.totalorder %s26, 0
      %p184 = por %p182, %p183
      %s186 = sadd.s32 %s185, 1
      %p189 = scmp.eq.s32.totalorder %s20, 2
      %p190 = scmp.ne.s32.totalorder %s185, %s187
      %p191 = scmp.eq.s32.totalorder %s20, 0
      %p192 = por %p190, %p191
      %p193 = scmp.ne.s32.totalorder %s185, %s187
      %p194 = scmp.eq.s32.totalorder %s25, 2
      %p195 = por %p193, %p194
      %p196 = scmp.ne.s32.totalorder %s187, %s188
      %p197 = scmp.eq.s32.totalorder %s25, 0
      %p198 = por %p196, %p197
      %p199 = scmp.ne.s32.totalorder %s187, %s188
      %p200 = scmp.eq.s32.totalorder %s26, 2
      %p201 = por %p199, %p200
      %p203 = scmp.ne.s32.totalorder %s188, %s202
      %p204 = scmp.eq.s32.totalorder %s26, 0
      %p205 = por %p203, %p204
      %s207 = sadd.s32 %s206, 1
      %p210 = scmp.eq.s32.totalorder %s20, 2
      %p211 = scmp.ne.s32.totalorder %s206, %s208
      %p212 = scmp.eq.s32.totalorder %s20, 0
      %p213 = por %p211, %p212
      %p214 = scmp.ne.s32.totalorder %s206, %s208
      %p215 = scmp.eq.s32.totalorder %s25, 2
      %p216 = por %p214, %p215
      %p217 = scmp.ne.s32.totalorder %s208, %s209
      %p218 = scmp.eq.s32.totalorder %s25, 0
      %p219 = por %p217, %p218
      %p220 = scmp.ne.s32.totalorder %s208, %s209
      %p221 = scmp.eq.s32.totalorder %s26, 2
      %p222 = por %p220, %p221
      %p224 = scmp.ne.s32.totalorder %s209, %s223
      %p225 = scmp.eq.s32.totalorder %s26, 0
      %p226 = por %p224, %p225
      %s228 = sadd.s32 %s227, 1
      %p231 = scmp.eq.s32.totalorder %s20, 2
      %p232 = scmp.ne.s32.totalorder %s227, %s229
      %p233 = scmp.eq.s32.totalorder %s20, 0
      %p234 = por %p232, %p233
      %p235 = scmp.ne.s32.totalorder %s227, %s229
      %p236 = scmp.eq.s32.totalorder %s25, 2
      %p237 = por %p235, %p236
      %p238 = scmp.ne.s32.totalorder %s229, %s230
      %p239 = scmp.eq.s32.totalorder %s25, 0
      %p240 = por %p238, %p239
      %p241 = scmp.ne.s32.totalorder %s229, %s230
      %p242 = scmp.eq.s32.totalorder %s26, 2
      %p243 = por %p241, %p242
      %p245 = scmp.ne.s32.totalorder %s230, %s244
      %p246 = scmp.eq.s32.totalorder %s26, 0
      %p247 = por %p245, %p246
      %s249 = sadd.s32 %s248, 1
      %p252 = scmp.eq.s32.totalorder %s20, 2
      %p253 = scmp.ne.s32.totalorder %s248, %s250
      %p254 = scmp.eq.s32.totalorder %s20, 0
      %p255 = por %p253, %p254
      %p256 = scmp.ne.s32.totalorder %s248, %s250
      %p257 = scmp.eq.s32.totalorder %s25, 2
      %p258 = por %p256, %p257
      %p259 = scmp.ne.s32.totalorder %s250, %s251
      %p260 = scmp.eq.s32.totalorder %s25, 0
      %p261 = por %p259, %p260
      %p262 = scmp.ne.s32.totalorder %s250, %s251
      %p263 = scmp.eq.s32.totalorder %s26, 2
      %p264 = por %p262, %p263
      %p266 = scmp.ne.s32.totalorder %s251, %s265
      %p267 = scmp.eq.s32.totalorder %s26, 0
      %p268 = por %p266, %p267
      %s269 = ssub.s32 %s20, %s27
      %p270 = scmp.eq.s32.totalorder %s269, 0
      %s272 = sadd.s32 %s271, 1
      %s273 = scalar_select %p270, %s271, %s272
      %p276 = pneg %p270
      %p277 = scmp.eq.s32.totalorder %s20, 2
      %p278 = por %p276, %p277
      %p279 = scmp.ne.s32.totalorder %s271, %s274
      %p280 = scmp.eq.s32.totalorder %s20, 0
      %p281 = por %p279, %p280
      %p282 = scmp.ne.s32.totalorder %s271, %s274
      %p283 = scmp.eq.s32.totalorder %s25, 2
      %p284 = por %p282, %p283
      %p285 = scmp.ne.s32.totalorder %s274, %s275
      %p286 = scmp.eq.s32.totalorder %s25, 0
      %p287 = por %p285, %p286
      %p288 = scmp.ne.s32.totalorder %s274, %s275
      %p289 = scmp.eq.s32.totalorder %s26, 2
      %p290 = por %p288, %p289
      %p292 = scmp.ne.s32.totalorder %s275, %s291
      %p293 = scmp.eq.s32.totalorder %s26, 0
      %p294 = por %p292, %p293
      %s295 = ssub.s32 %s20, %s27
      %p296 = scmp.eq.s32.totalorder %s295, 0
      %s298 = sadd.s32 %s297, 1
      %s299 = scalar_select %p296, %s297, %s298
      %p302 = pneg %p296
      %p303 = scmp.eq.s32.totalorder %s20, 2
      %p304 = por %p302, %p303
      %p305 = scmp.ne.s32.totalorder %s297, %s300
      %p306 = scmp.eq.s32.totalorder %s20, 0
      %p307 = por %p305, %p306
      %p308 = scmp.ne.s32.totalorder %s297, %s300
      %p309 = scmp.eq.s32.totalorder %s25, 2
      %p310 = por %p308, %p309
      %p311 = scmp.ne.s32.totalorder %s300, %s301
      %p312 = scmp.eq.s32.totalorder %s25, 0
      %p313 = por %p311, %p312
      %p314 = scmp.ne.s32.totalorder %s300, %s301
      %p315 = scmp.eq.s32.totalorder %s26, 2
      %p316 = por %p314, %p315
      %p318 = scmp.ne.s32.totalorder %s301, %s317
      %p319 = scmp.eq.s32.totalorder %s26, 0
      %p320 = por %p318, %p319
      %p321 = scmp.le.s32.totalorder 1, %s20
      %p322 = scmp.lt.s32.totalorder %s20, 4
      %p323 = pnand %p321, %p322
      %p324 = pneg %p323
      // Predicated region
      $region9: #{_agent_forward_2d.1} parent=5 // pred_check
        _
      $region10: #{_agent_forward_2d.1} parent=5 // pred_check_branch
        %326 = sbr.rel (%p323) target = $region12
      $region11: #{_agent_forward_2d.1} parent=5 // pred_region
        %s327 = ssub.s32 %s20, 1
        // Predicated region
        $region13: #{_agent_forward_2d.1} parent=11 // pred_check
          %p328 = pneg %p93
        $region14: #{_agent_forward_2d.1} parent=11 // pred_check_branch
          %330 = sbr.rel (%p328) target = $region16
        $region15: #{_agent_forward_2d.1} parent=11 // pred_region
          _
        $region16: #{_agent_forward_2d.1} parent=11 // pred_fallthru
          _
        // Predicated region
        $region17: #{_agent_forward_2d.1} parent=11 // pred_check
          %p331 = pneg %p114
        $region18: #{_agent_forward_2d.1} parent=11 // pred_check_branch
          %333 = sbr.rel (%p331) target = $region20
        $region19: #{_agent_forward_2d.1} parent=11 // pred_region
          _
        $region20: #{_agent_forward_2d.1} parent=11 // pred_fallthru
          _
        // Predicated region
        $region21: #{_agent_forward_2d.1} parent=11 // pred_check
          %p334 = pneg %p135
        $region22: #{_agent_forward_2d.1} parent=11 // pred_check_branch
          %336 = sbr.rel (%p334) target = $region24
        $region23: #{_agent_forward_2d.1} parent=11 // pred_region
          _
        $region24: #{_agent_forward_2d.1} parent=11 // pred_fallthru
          _
        // Predicated region
        $region25: #{_agent_forward_2d.1} parent=11 // pred_check
          %p337 = pneg %p156
        $region26: #{_agent_forward_2d.1} parent=11 // pred_check_branch
          %339 = sbr.rel (%p337) target = $region28
        $region27: #{_agent_forward_2d.1} parent=11 // pred_region
          _
        $region28: #{_agent_forward_2d.1} parent=11 // pred_fallthru
          _
        // Predicated region
        $region29: #{_agent_forward_2d.1} parent=11 // pred_check
          %p340 = pneg %p177
        $region30: #{_agent_forward_2d.1} parent=11 // pred_check_branch
          %342 = sbr.rel (%p340) target = $region32
        $region31: #{_agent_forward_2d.1} parent=11 // pred_region
          _
        $region32: #{_agent_forward_2d.1} parent=11 // pred_fallthru
          _
        // Predicated region
        $region33: #{_agent_forward_2d.1} parent=11 // pred_check
          %p343 = pneg %p198
        $region34: #{_agent_forward_2d.1} parent=11 // pred_check_branch
          %345 = sbr.rel (%p343) target = $region36
        $region35: #{_agent_forward_2d.1} parent=11 // pred_region
          %s347 = ssub.s32 4096, 4096
          %348 = vsyncadd [#allocation3], %s347
          %s349 = sshll.u32 [#allocation2], 4
          %s350 = int_to_ptr.vmem [resolvable:$true] %s349
          %355 = dma.hbm_to_vmem [thread:$0]  %s7, 4096, %s350, [#allocation3], 128, 128, 8
        $region36: #{_agent_forward_2d.1} parent=11 // pred_fallthru
          _
        // Predicated region
        $region37: #{_agent_forward_2d.1} parent=11 // pred_check
          %p356 = pneg %p219
        $region38: #{_agent_forward_2d.1} parent=11 // pred_check_branch
          %358 = sbr.rel (%p356) target = $region40
        $region39: #{_agent_forward_2d.1} parent=11 // pred_region
          _
        $region40: #{_agent_forward_2d.1} parent=11 // pred_fallthru
          _
        // Predicated region
        $region41: #{_agent_forward_2d.1} parent=11 // pred_check
          %p359 = pneg %p240
        $region42: #{_agent_forward_2d.1} parent=11 // pred_check_branch
          %361 = sbr.rel (%p359) target = $region44
        $region43: #{_agent_forward_2d.1} parent=11 // pred_region
          _
        $region44: #{_agent_forward_2d.1} parent=11 // pred_fallthru
          _
        // Predicated region
        $region45: #{_agent_forward_2d.1} parent=11 // pred_check
          %p362 = pneg %p261
        $region46: #{_agent_forward_2d.1} parent=11 // pred_check_branch
          %364 = sbr.rel (%p362) target = $region48
        $region47: #{_agent_forward_2d.1} parent=11 // pred_region
          _
        $region48: #{_agent_forward_2d.1} parent=11 // pred_fallthru
          _
      $region12: #{_agent_forward_2d.1} parent=5 // pred_fallthru
        _
      %p365 = scmp.lt.s32.totalorder %s20, 3
      // Predicated region
      $region49: #{_agent_forward_2d.1} parent=5 // pred_check
        %p366 = pneg %p365
      $region50: #{_agent_forward_2d.1} parent=5 // pred_check_branch
        %368 = sbr.rel (%p366) target = $region52
      $region51: #{_agent_forward_2d.1} parent=5 // pred_region
        // Predicated region
        $region53: #{_agent_forward_2d.1} parent=51 // pred_check
          %p369 = pneg %p40
        $region54: #{_agent_forward_2d.1} parent=51 // pred_check_branch
          %371 = sbr.rel (%p369) target = $region56
        $region55: #{_agent_forward_2d.1} parent=51 // pred_region
          %s372 = smul.u32 2, %s20
          %p373 = scmp.lt.s32.totalorder %s372, 5
          %s374 = scalar_select %p373, %s372, 5
          %s375 = smul.addr %s374, 8
          %s376 = scalar_lea.vmem %s0, %s375
          %s377 = smul.u32 2, %s20
        $region56: #{_agent_forward_2d.1} parent=51 // pred_fallthru
          _
        // Predicated region
        $region57: #{_agent_forward_2d.1} parent=51 // pred_check
          %p378 = pneg %p66
        $region58: #{_agent_forward_2d.1} parent=51 // pred_check_branch
          %380 = sbr.rel (%p378) target = $region60
        $region59: #{_agent_forward_2d.1} parent=51 // pred_region
          %s381 = smul.u32 2, %s20
          %p382 = scmp.lt.s32.totalorder %s381, 5
          %s383 = scalar_select %p382, %s381, 5
          %s384 = smul.addr %s383, 8
          %s385 = scalar_lea.vmem %s1, %s384
          %s386 = smul.u32 2, %s20
        $region60: #{_agent_forward_2d.1} parent=51 // pred_fallthru
          _
      $region52: #{_agent_forward_2d.1} parent=5 // pred_fallthru
        _
      %p387 = scmp.le.s32.totalorder 1, %s20
      %p388 = scmp.lt.s32.totalorder %s20, 4
      %p389 = pnand %p387, %p388
      %p390 = pneg %p389
      // Predicated region
      $region61: #{_agent_forward_2d.1} parent=5 // pred_check
        _
      $region62: #{_agent_forward_2d.1} parent=5 // pred_check_branch
        %392 = sbr.rel (%p389) target = $region64
      $region63: #{_agent_forward_2d.1} parent=5 // pred_region
        %s393 = ssub.s32 %s20, 1
        // Predicated region
        $region65: #{_agent_forward_2d.1} parent=63 // pred_check
          %p394 = pneg %p198
        $region66: #{_agent_forward_2d.1} parent=63 // pred_check_branch
          %396 = sbr.rel (%p394) target = $region68
        $region67: #{_agent_forward_2d.1} parent=63 // pred_region
          %397 = dma.done [#allocation3], 4096
        $region68: #{_agent_forward_2d.1} parent=63 // pred_fallthru
          _
        %s398 = smul.u32 2, %s25
        %p399 = scmp.lt.s32.totalorder %s398, 5
        %s400 = scalar_select %p399, %s398, 5
        %s401 = smul.addr %s400, 8
        %s402 = scalar_lea.vmem %s0, %s401
        %p403 = pneg %p46
        %p404 = pneg %p43
        %s405 = smul.u32 2, %s25
        %p406 = scmp.lt.s32.totalorder %s405, 5
        %s407 = scalar_select %p406, %s405, 5
        %s408 = smul.addr %s407, 8
        %s409 = scalar_lea.vmem %s1, %s408
        %p410 = pneg %p72
        %p411 = pneg %p69
        %p412 = pneg %p93
        %p413 = pneg %p90
        %p414 = pneg %p114
        %p415 = pneg %p111
        %p416 = pneg %p135
        %p417 = pneg %p132
        %p418 = pneg %p156
        %p419 = pneg %p153
        %p420 = pneg %p177
        %p421 = pneg %p174
        %p422 = pneg %p198
        %p423 = pneg %p195
        %p424 = pneg %p219
        %p425 = pneg %p216
        %p426 = pneg %p240
        %p427 = pneg %p237
        %p428 = pneg %p261
        %p429 = pneg %p258
        %p430 = pneg %p287
        %p431 = pneg %p284
        %s432 = smul.u32 2, %s25
        %p433 = scmp.lt.s32.totalorder %s432, 5
        %s434 = scalar_select %p433, %s432, 5
        %s435 = smul.addr %s434, 8
        %s436 = scalar_lea.vmem %s11, %s435
        %p437 = pneg %p313
        %p438 = pneg %p310
        %s439 = smul.u32 2, %s25
        %p440 = scmp.lt.s32.totalorder %s439, 5
        %s441 = scalar_select %p440, %s439, 5
        %s442 = smul.addr %s441, 8
        %s443 = scalar_lea.vmem %s12, %s442
        %s444 = smul.u32 2, %s25
        %p445 = scmp.lt.s32.totalorder %s444, 5
        %s446 = scalar_select %p445, %s444, 5
        %s447 = smul.addr %s446, 8
        %s448 = scalar_lea.vmem %s0, %s447
        %s449 = smul.u32 2, %s25
        %s450 = smul.u32 2, %s25
        %p451 = scmp.lt.s32.totalorder %s450, 5
        %s452 = scalar_select %p451, %s450, 5
        %s453 = smul.addr %s452, 8
        %s454 = scalar_lea.vmem %s1, %s453
        %s455 = smul.u32 2, %s25
        %s456 = smul.u32 2, %s25
        %p457 = scmp.lt.s32.totalorder %s456, 5
        %s458 = scalar_select %p457, %s456, 5
        %s459 = smul.addr %s458, 8
        %s460 = scalar_lea.vmem %s11, %s459
        %s461 = smul.u32 2, %s25
        %s462 = smul.u32 2, %s25
        %p463 = scmp.lt.s32.totalorder %s462, 5
        %s464 = scalar_select %p463, %s462, 5
        %s465 = smul.addr %s464, 8
        %s466 = scalar_lea.vmem %s12, %s465
        %s467 = smul.u32 2, %s25
        %v469 = vld [vmem:[%s448] sm:$0xff]
        %v470 = vld [vmem:[%s448 + $0x8] sm:$0xff]
        %v471 = vpack.c.bf16 %v470, %v469
        %v472 = vld [vmem:[%s2] sm:$0xff]
        %v473 = vld [vmem:[%s454] sm:$0xff]
        %v474 = vld [vmem:[%s454 + $0x8] sm:$0xff]
        %v475 = vpack.c.bf16 %v474, %v473
        %v476 = vld [vmem:[%s3] sm:$0xff]
        %v477 = vld [vmem:[%s3 + $0x8] sm:$0xff]
        %v480 = vunpack.c.l.b16 %v476
        %v481 = vunpack.c.h.b16 %v476
        %v482 = vunpack.c.l.b16 %v477
        %v483 = vunpack.c.h.b16 %v477
        %v484 = vpack.c.b16 %v482, %v480
        %v485 = vpack.c.b16 %v483, %v481
        %vm488 = vcmask 130048
        %v490 = vsel %vm488, %v475, 0
        %492 = vmatprep.subr.bf16.mxu0 0
        %493 = vmatpush1.bf16.msra.mxu0 0
        %494 = vmatprep.subr.bf16.mxu0 0
        %495 = vmatpush1.bf16.msra.mxu0 0
        %496 = vmatprep.subr.bf16.mxu0 0
        %497 = vmatpush1.bf16.msra.mxu0 0
        %498 = vmatprep.subr.bf16.mxu0 0
        %499 = vmatpush1.bf16.msra.mxu0 0
        %500 = vmatprep.subr.bf16.mxu0 0
        %501 = vmatpush1.bf16.msra.mxu0 0
        %502 = vmatprep.subr.bf16.mxu0 0
        %503 = vmatpush1.bf16.msra.mxu0 0
        %504 = vmatprep.subr.bf16.mxu0 0
        %505 = vmatpush1.bf16.msra.mxu0 0
        %506 = vmatprep.subr.bf16.mxu0 %v485
        %507 = vmatpush1.bf16.msra.mxu0 %v484
        %508 = vmatprep.subr.bf16.mxu0 0
        %509 = vmatpush2.bf16.msra.mxu0 0
        %510 = vmatprep.subr.bf16.mxu0 0
        %511 = vmatpush2.bf16.msra.mxu0 0
        %512 = vmatprep.subr.bf16.mxu0 0
        %513 = vmatpush2.bf16.msra.mxu0 0
        %514 = vmatprep.subr.bf16.mxu0 0
        %515 = vmatpush2.bf16.msra.mxu0 0
        %516 = vmatprep.subr.bf16.mxu0 0
        %517 = vmatpush2.bf16.msra.mxu0 0
        %518 = vmatprep.subr.bf16.mxu0 0
        %519 = vmatpush2.bf16.msra.mxu0 0
        %520 = vmatprep.subr.bf16.mxu0 0
        %521 = vmatpush2.bf16.msra.mxu0 0
        %522 = vmatprep.subr.bf16.mxu0 0
        %523 = vmatpush2.bf16.msra.mxu0 0
        %524 = vmatprep.mubr.bf16.mxu0 0
        %525 = vmatmul.mubr.bf16.gmra.mxu0 %v490
        %v526 = vpop.f32.mrf.mxu0
        %v527 = vadd.f32 0.0, %v526
        %v528 = vpop.f32.mrf.mxu0
        %v529 = vadd.f32 0.0, %v528
        %v530 = vpop.f32.mrf.mxu0
        %v531 = vadd.f32 0.0, %v530
        %v532 = vpop.f32.mrf.mxu0
        %v533 = vadd.f32 0.0, %v532
        %534 = vdwg.mxu0
        %v536 = vunpack.c.l.b16 %v472
        %v537 = vunpack.c.h.b16 %v472
        %v538 = vpack.c.b16 %v536, %v536
        %v539 = vpack.c.b16 %v537, %v537
        %vm540 = vcmask 64512
        %v542 = vsel %vm540, %v471, 0
        %vm544 = vcmask 1043456
        %v546 = vsel %vm544, %v538, 0
        %v549 = vsel %vm544, %v539, 0
        %551 = vmatprep.subr.bf16.mxu0 0
        %552 = vmatpush1.bf16.msra.mxu0 0
        %553 = vmatprep.subr.bf16.mxu0 0
        %554 = vmatpush1.bf16.msra.mxu0 0
        %555 = vmatprep.subr.bf16.mxu0 0
        %556 = vmatpush1.bf16.msra.mxu0 0
        %557 = vmatprep.subr.bf16.mxu0 0
        %558 = vmatpush1.bf16.msra.mxu0 0
        %559 = vmatprep.subr.bf16.mxu0 0
        %560 = vmatpush1.bf16.msra.mxu0 0
        %561 = vmatprep.subr.bf16.mxu0 0
        %562 = vmatpush1.bf16.msra.mxu0 0
        %563 = vmatprep.subr.bf16.mxu0 0
        %564 = vmatpush1.bf16.msra.mxu0 0
        %565 = vmatprep.subr.bf16.mxu0 %v549
        %566 = vmatpush1.bf16.msra.mxu0 %v546
        %567 = vmatprep.subr.bf16.mxu0 0
        %568 = vmatpush2.bf16.msra.mxu0 0
        %569 = vmatprep.subr.bf16.mxu0 0
        %570 = vmatpush2.bf16.msra.mxu0 0
        %571 = vmatprep.subr.bf16.mxu0 0
        %572 = vmatpush2.bf16.msra.mxu0 0
        %573 = vmatprep.subr.bf16.mxu0 0
        %574 = vmatpush2.bf16.msra.mxu0 0
        %575 = vmatprep.subr.bf16.mxu0 0
        %576 = vmatpush2.bf16.msra.mxu0 0
        %577 = vmatprep.subr.bf16.mxu0 0
        %578 = vmatpush2.bf16.msra.mxu0 0
        %579 = vmatprep.subr.bf16.mxu0 0
        %580 = vmatpush2.bf16.msra.mxu0 0
        %581 = vmatprep.subr.bf16.mxu0 0
        %582 = vmatpush2.bf16.msra.mxu0 0
        %583 = vmatprep.mubr.bf16.mxu0 0
        %584 = vmatmul.mubr.bf16.gmra.mxu0 %v542
        %v585 = vpop.f32.mrf.mxu0
        %v586 = vadd.f32 %v527, %v585
        %v587 = vpop.f32.mrf.mxu0
        %v588 = vadd.f32 %v529, %v587
        %v589 = vpop.f32.mrf.mxu0
        %v590 = vadd.f32 %v531, %v589
        %v591 = vpop.f32.mrf.mxu0
        %v592 = vadd.f32 %v533, %v591
        %593 = vdwg.mxu0
        %v594 = vld [vmem:[%s4] sm:$0x3]
        %v596 = vlaneseq
        %v597 = vshrl.u32 %v596, 7
        %v598 = vsub.s32 0, %v597
        %v599 = vrot.slane %v594, %v598
        %v600 = vlaneseq
        %v601 = vshrl.u32 %v600, 7
        %v602 = vsub.s32 1, %v601
        %v603 = vrot.slane %v594, %v602
        %v606 = vadd.f32 %v586, %v599
        %v607 = vadd.f32 %v588, %v603
        %v608 = vadd.f32 %v590, %v599
        %v609 = vadd.f32 %v592, %v603
        %v610 = vtanh.pop %v606
        %v611 = vtanh.pop %v607
        %v612 = vtanh.pop %v608
        %v613 = vtanh.pop %v609
        %v614 = vpack.c.bf16 %v612, %v610
        %v615 = vpack.c.bf16 %v613, %v611
        %v616 = vld [vmem:[%s5] sm:$0xff]
        %v617 = vld [vmem:[%s5 + $0x8] sm:$0xff]
        %v618 = vld [vmem:[%s5 + $0x10] sm:$0xff]
        %v619 = vld [vmem:[%s5 + $0x18] sm:$0xff]
        %v620 = vld [vmem:[%s5 + $0x20] sm:$0xff]
        %v621 = vld [vmem:[%s5 + $0x28] sm:$0xff]
        %v622 = vld [vmem:[%s5 + $0x30] sm:$0xff]
        %v623 = vld [vmem:[%s5 + $0x38] sm:$0xff]
        %v624 = vld [vmem:[%s5 + $0x40] sm:$0xff]
        %v625 = vld [vmem:[%s5 + $0x48] sm:$0xff]
        %v626 = vld [vmem:[%s5 + $0x50] sm:$0xff]
        %v627 = vld [vmem:[%s5 + $0x58] sm:$0xff]
        %v628 = vld [vmem:[%s5 + $0x60] sm:$0xff]
        %v629 = vld [vmem:[%s5 + $0x68] sm:$0xff]
        %v630 = vld [vmem:[%s5 + $0x70] sm:$0xff]
        %v631 = vld [vmem:[%s5 + $0x78] sm:$0xff]
        %v632 = vld [vmem:[%s5 + $0x80] sm:$0xff]
        %v633 = vld [vmem:[%s5 + $0x88] sm:$0xff]
        %v634 = vld [vmem:[%s5 + $0x90] sm:$0xff]
        %v635 = vld [vmem:[%s5 + $0x98] sm:$0xff]
        %v636 = vld [vmem:[%s5 + $0xa0] sm:$0xff]
        %v637 = vld [vmem:[%s5 + $0xa8] sm:$0xff]
        %v638 = vld [vmem:[%s5 + $0xb0] sm:$0xff]
        %v639 = vld [vmem:[%s5 + $0xb8] sm:$0xff]
        %v640 = vld [vmem:[%s5 + $0xc0] sm:$0xff]
        %v641 = vld [vmem:[%s5 + $0xc8] sm:$0xff]
        %v642 = vld [vmem:[%s5 + $0xd0] sm:$0xff]
        %v643 = vld [vmem:[%s5 + $0xd8] sm:$0xff]
        %v644 = vld [vmem:[%s5 + $0xe0] sm:$0xff]
        %v645 = vld [vmem:[%s5 + $0xe8] sm:$0xff]
        %v646 = vld [vmem:[%s5 + $0xf0] sm:$0xff]
        %v647 = vld [vmem:[%s5 + $0xf8] sm:$0xff]
        %v648 = vld [vmem:[%s6] sm:$0x3]
        %v650 = vlaneseq
        %v651 = vshrl.u32 %v650, 7
        %v652 = vsub.s32 0, %v651
        %v653 = vrot.slane %v648, %v652
        %v654 = vlaneseq
        %v655 = vshrl.u32 %v654, 7
        %v656 = vsub.s32 1, %v655
        %v657 = vrot.slane %v648, %v656
        %v692 = vunpack.c.l.b16 %v616
        %v693 = vunpack.c.h.b16 %v616
        %v694 = vunpack.c.l.b16 %v617
        %v695 = vunpack.c.h.b16 %v617
        %v696 = vunpack.c.l.b16 %v618
        %v697 = vunpack.c.h.b16 %v618
        %v698 = vunpack.c.l.b16 %v619
        %v699 = vunpack.c.h.b16 %v619
        %v700 = vunpack.c.l.b16 %v620
        %v701 = vunpack.c.h.b16 %v620
        %v702 = vunpack.c.l.b16 %v621
        %v703 = vunpack.c.h.b16 %v621
        %v704 = vunpack.c.l.b16 %v622
        %v705 = vunpack.c.h.b16 %v622
        %v706 = vunpack.c.l.b16 %v623
        %v707 = vunpack.c.h.b16 %v623
        %v708 = vunpack.c.l.b16 %v624
        %v709 = vunpack.c.h.b16 %v624
        %v710 = vunpack.c.l.b16 %v625
        %v711 = vunpack.c.h.b16 %v625
        %v712 = vunpack.c.l.b16 %v626
        %v713 = vunpack.c.h.b16 %v626
        %v714 = vunpack.c.l.b16 %v627
        %v715 = vunpack.c.h.b16 %v627
        %v716 = vunpack.c.l.b16 %v628
        %v717 = vunpack.c.h.b16 %v628
        %v718 = vunpack.c.l.b16 %v629
        %v719 = vunpack.c.h.b16 %v629
        %v720 = vunpack.c.l.b16 %v630
        %v721 = vunpack.c.h.b16 %v630
        %v722 = vunpack.c.l.b16 %v631
        %v723 = vunpack.c.h.b16 %v631
        %v724 = vunpack.c.l.b16 %v632
        %v725 = vunpack.c.h.b16 %v632
        %v726 = vunpack.c.l.b16 %v633
        %v727 = vunpack.c.h.b16 %v633
        %v728 = vunpack.c.l.b16 %v634
        %v729 = vunpack.c.h.b16 %v634
        %v730 = vunpack.c.l.b16 %v635
        %v731 = vunpack.c.h.b16 %v635
        %v732 = vunpack.c.l.b16 %v636
        %v733 = vunpack.c.h.b16 %v636
        %v734 = vunpack.c.l.b16 %v637
        %v735 = vunpack.c.h.b16 %v637
        %v736 = vunpack.c.l.b16 %v638
        %v737 = vunpack.c.h.b16 %v638
        %v738 = vunpack.c.l.b16 %v639
        %v739 = vunpack.c.h.b16 %v639
        %v740 = vunpack.c.l.b16 %v640
        %v741 = vunpack.c.h.b16 %v640
        %v742 = vunpack.c.l.b16 %v641
        %v743 = vunpack.c.h.b16 %v641
        %v744 = vunpack.c.l.b16 %v642
        %v745 = vunpack.c.h.b16 %v642
        %v746 = vunpack.c.l.b16 %v643
        %v747 = vunpack.c.h.b16 %v643
        %v748 = vunpack.c.l.b16 %v644
        %v749 = vunpack.c.h.b16 %v644
        %v750 = vunpack.c.l.b16 %v645
        %v751 = vunpack.c.h.b16 %v645
        %v752 = vunpack.c.l.b16 %v646
        %v753 = vunpack.c.h.b16 %v646
        %v754 = vunpack.c.l.b16 %v647
        %v755 = vunpack.c.h.b16 %v647
        %v756 = vpack.c.b16 %v694, %v692
        %v757 = vpack.c.b16 %v695, %v693
        %v758 = vpack.c.b16 %v698, %v696
        %v759 = vpack.c.b16 %v699, %v697
        %v760 = vpack.c.b16 %v702, %v700
        %v761 = vpack.c.b16 %v703, %v701
        %v762 = vpack.c.b16 %v706, %v704
        %v763 = vpack.c.b16 %v707, %v705
        %v764 = vpack.c.b16 %v710, %v708
        %v765 = vpack.c.b16 %v711, %v709
        %v766 = vpack.c.b16 %v714, %v712
        %v767 = vpack.c.b16 %v715, %v713
        %v768 = vpack.c.b16 %v718, %v716
        %v769 = vpack.c.b16 %v719, %v717
        %v770 = vpack.c.b16 %v722, %v720
        %v771 = vpack.c.b16 %v723, %v721
        %v772 = vpack.c.b16 %v726, %v724
        %v773 = vpack.c.b16 %v727, %v725
        %v774 = vpack.c.b16 %v730, %v728
        %v775 = vpack.c.b16 %v731, %v729
        %v776 = vpack.c.b16 %v734, %v732
        %v777 = vpack.c.b16 %v735, %v733
        %v778 = vpack.c.b16 %v738, %v736
        %v779 = vpack.c.b16 %v739, %v737
        %v780 = vpack.c.b16 %v742, %v740
        %v781 = vpack.c.b16 %v743, %v741
        %v782 = vpack.c.b16 %v746, %v744
        %v783 = vpack.c.b16 %v747, %v745
        %v784 = vpack.c.b16 %v750, %v748
        %v785 = vpack.c.b16 %v751, %v749
        %v786 = vpack.c.b16 %v754, %v752
        %v787 = vpack.c.b16 %v755, %v753
        %820 = vmatprep.subr.bf16.mxu0 %v771
        %821 = vmatpush1.bf16.msra.mxu0 %v770
        %822 = vmatprep.subr.bf16.mxu0 %v769
        %823 = vmatpush1.bf16.msra.mxu0 %v768
        %824 = vmatprep.subr.bf16.mxu0 %v767
        %825 = vmatpush1.bf16.msra.mxu0 %v766
        %826 = vmatprep.subr.bf16.mxu0 %v765
        %827 = vmatpush1.bf16.msra.mxu0 %v764
        %828 = vmatprep.subr.bf16.mxu0 %v763
        %829 = vmatpush1.bf16.msra.mxu0 %v762
        %830 = vmatprep.subr.bf16.mxu0 %v761
        %831 = vmatpush1.bf16.msra.mxu0 %v760
        %832 = vmatprep.subr.bf16.mxu0 %v759
        %833 = vmatpush1.bf16.msra.mxu0 %v758
        %834 = vmatprep.subr.bf16.mxu0 %v757
        %835 = vmatpush1.bf16.msra.mxu0 %v756
        %836 = vmatprep.subr.bf16.mxu0 %v787
        %837 = vmatpush2.bf16.msra.mxu0 %v786
        %838 = vmatprep.subr.bf16.mxu0 %v785
        %839 = vmatpush2.bf16.msra.mxu0 %v784
        %840 = vmatprep.subr.bf16.mxu0 %v783
        %841 = vmatpush2.bf16.msra.mxu0 %v782
        %842 = vmatprep.subr.bf16.mxu0 %v781
        %843 = vmatpush2.bf16.msra.mxu0 %v780
        %844 = vmatprep.subr.bf16.mxu0 %v779
        %845 = vmatpush2.bf16.msra.mxu0 %v778
        %846 = vmatprep.subr.bf16.mxu0 %v777
        %847 = vmatpush2.bf16.msra.mxu0 %v776
        %848 = vmatprep.subr.bf16.mxu0 %v775
        %849 = vmatpush2.bf16.msra.mxu0 %v774
        %850 = vmatprep.subr.bf16.mxu0 %v773
        %851 = vmatpush2.bf16.msra.mxu0 %v772
        %852 = vmatprep.mubr.bf16.mxu0 %v615
        %853 = vmatmul.mubr.bf16.gmra.mxu0 %v614
        %v854 = vpop.f32.mrf.mxu0
        %v855 = vadd.f32 %v653, %v854
        %v856 = vpop.f32.mrf.mxu0
        %v857 = vadd.f32 %v657, %v856
        %v858 = vpop.f32.mrf.mxu0
        %v859 = vadd.f32 %v653, %v858
        %v860 = vpop.f32.mrf.mxu0
        %v861 = vadd.f32 %v657, %v860
        %862 = vdwg.mxu0
        %v863 = vtanh.pop %v855
        %v864 = vtanh.pop %v857
        %v865 = vtanh.pop %v859
        %v866 = vtanh.pop %v861
        %v867 = vpack.c.bf16 %v865, %v863
        %v868 = vpack.c.bf16 %v866, %v864
        %v869 = vld [vmem:[#allocation2] sm:$0xff]
        %v870 = vld [vmem:[#allocation2 + $0x8] sm:$0xff]
        %v871 = vld [vmem:[#allocation2 + $0x10] sm:$0xff]
        %v872 = vld [vmem:[#allocation2 + $0x18] sm:$0xff]
        %v873 = vld [vmem:[#allocation2 + $0x20] sm:$0xff]
        %v874 = vld [vmem:[#allocation2 + $0x28] sm:$0xff]
        %v875 = vld [vmem:[#allocation2 + $0x30] sm:$0xff]
        %v876 = vld [vmem:[#allocation2 + $0x38] sm:$0xff]
        %v877 = vld [vmem:[#allocation2 + $0x40] sm:$0xff]
        %v878 = vld [vmem:[#allocation2 + $0x48] sm:$0xff]
        %v879 = vld [vmem:[#allocation2 + $0x50] sm:$0xff]
        %v880 = vld [vmem:[#allocation2 + $0x58] sm:$0xff]
        %v881 = vld [vmem:[#allocation2 + $0x60] sm:$0xff]
        %v882 = vld [vmem:[#allocation2 + $0x68] sm:$0xff]
        %v883 = vld [vmem:[#allocation2 + $0x70] sm:$0xff]
        %v884 = vld [vmem:[#allocation2 + $0x78] sm:$0xff]
        %v885 = vld [vmem:[#allocation2 + $0x80] sm:$0xff]
        %v886 = vld [vmem:[#allocation2 + $0x88] sm:$0xff]
        %v887 = vld [vmem:[#allocation2 + $0x90] sm:$0xff]
        %v888 = vld [vmem:[#allocation2 + $0x98] sm:$0xff]
        %v889 = vld [vmem:[#allocation2 + $0xa0] sm:$0xff]
        %v890 = vld [vmem:[#allocation2 + $0xa8] sm:$0xff]
        %v891 = vld [vmem:[#allocation2 + $0xb0] sm:$0xff]
        %v892 = vld [vmem:[#allocation2 + $0xb8] sm:$0xff]
        %v893 = vld [vmem:[#allocation2 + $0xc0] sm:$0xff]
        %v894 = vld [vmem:[#allocation2 + $0xc8] sm:$0xff]
        %v895 = vld [vmem:[#allocation2 + $0xd0] sm:$0xff]
        %v896 = vld [vmem:[#allocation2 + $0xd8] sm:$0xff]
        %v897 = vld [vmem:[#allocation2 + $0xe0] sm:$0xff]
        %v898 = vld [vmem:[#allocation2 + $0xe8] sm:$0xff]
        %v899 = vld [vmem:[#allocation2 + $0xf0] sm:$0xff]
        %v900 = vld [vmem:[#allocation2 + $0xf8] sm:$0xff]
        %v901 = vld [vmem:[%s8] sm:$0x3]
        %v903 = vlaneseq
        %v904 = vshrl.u32 %v903, 7
        %v905 = vsub.s32 0, %v904
        %v906 = vrot.slane %v901, %v905
        %v907 = vlaneseq
        %v908 = vshrl.u32 %v907, 7
        %v909 = vsub.s32 1, %v908
        %v910 = vrot.slane %v901, %v909
        %v945 = vunpack.c.l.b16 %v869
        %v946 = vunpack.c.h.b16 %v869
        %v947 = vunpack.c.l.b16 %v870
        %v948 = vunpack.c.h.b16 %v870
        %v949 = vunpack.c.l.b16 %v871
        %v950 = vunpack.c.h.b16 %v871
        %v951 = vunpack.c.l.b16 %v872
        %v952 = vunpack.c.h.b16 %v872
        %v953 = vunpack.c.l.b16 %v873
        %v954 = vunpack.c.h.b16 %v873
        %v955 = vunpack.c.l.b16 %v874
        %v956 = vunpack.c.h.b16 %v874
        %v957 = vunpack.c.l.b16 %v875
        %v958 = vunpack.c.h.b16 %v875
        %v959 = vunpack.c.l.b16 %v876
        %v960 = vunpack.c.h.b16 %v876
        %v961 = vunpack.c.l.b16 %v877
        %v962 = vunpack.c.h.b16 %v877
        %v963 = vunpack.c.l.b16 %v878
        %v964 = vunpack.c.h.b16 %v878
        %v965 = vunpack.c.l.b16 %v879
        %v966 = vunpack.c.h.b16 %v879
        %v967 = vunpack.c.l.b16 %v880
        %v968 = vunpack.c.h.b16 %v880
        %v969 = vunpack.c.l.b16 %v881
        %v970 = vunpack.c.h.b16 %v881
        %v971 = vunpack.c.l.b16 %v882
        %v972 = vunpack.c.h.b16 %v882
        %v973 = vunpack.c.l.b16 %v883
        %v974 = vunpack.c.h.b16 %v883
        %v975 = vunpack.c.l.b16 %v884
        %v976 = vunpack.c.h.b16 %v884
        %v977 = vunpack.c.l.b16 %v885
        %v978 = vunpack.c.h.b16 %v885
        %v979 = vunpack.c.l.b16 %v886
        %v980 = vunpack.c.h.b16 %v886
        %v981 = vunpack.c.l.b16 %v887
        %v982 = vunpack.c.h.b16 %v887
        %v983 = vunpack.c.l.b16 %v888
        %v984 = vunpack.c.h.b16 %v888
        %v985 = vunpack.c.l.b16 %v889
        %v986 = vunpack.c.h.b16 %v889
        %v987 = vunpack.c.l.b16 %v890
        %v988 = vunpack.c.h.b16 %v890
        %v989 = vunpack.c.l.b16 %v891
        %v990 = vunpack.c.h.b16 %v891
        %v991 = vunpack.c.l.b16 %v892
        %v992 = vunpack.c.h.b16 %v892
        %v993 = vunpack.c.l.b16 %v893
        %v994 = vunpack.c.h.b16 %v893
        %v995 = vunpack.c.l.b16 %v894
        %v996 = vunpack.c.h.b16 %v894
        %v997 = vunpack.c.l.b16 %v895
        %v998 = vunpack.c.h.b16 %v895
        %v999 = vunpack.c.l.b16 %v896
        %v1000 = vunpack.c.h.b16 %v896
        %v1001 = vunpack.c.l.b16 %v897
        %v1002 = vunpack.c.h.b16 %v897
        %v1003 = vunpack.c.l.b16 %v898
        %v1004 = vunpack.c.h.b16 %v898
        %v1005 = vunpack.c.l.b16 %v899
        %v1006 = vunpack.c.h.b16 %v899
        %v1007 = vunpack.c.l.b16 %v900
        %v1008 = vunpack.c.h.b16 %v900
        %v1009 = vpack.c.b16 %v947, %v945
        %v1010 = vpack.c.b16 %v948, %v946
        %v1011 = vpack.c.b16 %v951, %v949
        %v1012 = vpack.c.b16 %v952, %v950
        %v1013 = vpack.c.b16 %v955, %v953
        %v1014 = vpack.c.b16 %v956, %v954
        %v1015 = vpack.c.b16 %v959, %v957
        %v1016 = vpack.c.b16 %v960, %v958
        %v1017 = vpack.c.b16 %v963, %v961
        %v1018 = vpack.c.b16 %v964, %v962
        %v1019 = vpack.c.b16 %v967, %v965
        %v1020 = vpack.c.b16 %v968, %v966
        %v1021 = vpack.c.b16 %v971, %v969
        %v1022 = vpack.c.b16 %v972, %v970
        %v1023 = vpack.c.b16 %v975, %v973
        %v1024 = vpack.c.b16 %v976, %v974
        %v1025 = vpack.c.b16 %v979, %v977
        %v1026 = vpack.c.b16 %v980, %v978
        %v1027 = vpack.c.b16 %v983, %v981
        %v1028 = vpack.c.b16 %v984, %v982
        %v1029 = vpack.c.b16 %v987, %v985
        %v1030 = vpack.c.b16 %v988, %v986
        %v1031 = vpack.c.b16 %v991, %v989
        %v1032 = vpack.c.b16 %v992, %v990
        %v1033 = vpack.c.b16 %v995, %v993
        %v1034 = vpack.c.b16 %v996, %v994
        %v1035 = vpack.c.b16 %v999, %v997
        %v1036 = vpack.c.b16 %v1000, %v998
        %v1037 = vpack.c.b16 %v1003, %v1001
        %v1038 = vpack.c.b16 %v1004, %v1002
        %v1039 = vpack.c.b16 %v1007, %v1005
        %v1040 = vpack.c.b16 %v1008, %v1006
        %1073 = vmatprep.subr.bf16.mxu0 %v1024
        %1074 = vmatpush1.bf16.msra.mxu0 %v1023
        %1075 = vmatprep.subr.bf16.mxu0 %v1022
        %1076 = vmatpush1.bf16.msra.mxu0 %v1021
        %1077 = vmatprep.subr.bf16.mxu0 %v1020
        %1078 = vmatpush1.bf16.msra.mxu0 %v1019
        %1079 = vmatprep.subr.bf16.mxu0 %v1018
        %1080 = vmatpush1.bf16.msra.mxu0 %v1017
        %1081 = vmatprep.subr.bf16.mxu0 %v1016
        %1082 = vmatpush1.bf16.msra.mxu0 %v1015
        %1083 = vmatprep.subr.bf16.mxu0 %v1014
        %1084 = vmatpush1.bf16.msra.mxu0 %v1013
        %1085 = vmatprep.subr.bf16.mxu0 %v1012
        %1086 = vmatpush1.bf16.msra.mxu0 %v1011
        %1087 = vmatprep.subr.bf16.mxu0 %v1010
        %1088 = vmatpush1.bf16.msra.mxu0 %v1009
        %1089 = vmatprep.subr.bf16.mxu0 %v1040
        %1090 = vmatpush2.bf16.msra.mxu0 %v1039
        %1091 = vmatprep.subr.bf16.mxu0 %v1038
        %1092 = vmatpush2.bf16.msra.mxu0 %v1037
        %1093 = vmatprep.subr.bf16.mxu0 %v1036
        %1094 = vmatpush2.bf16.msra.mxu0 %v1035
        %1095 = vmatprep.subr.bf16.mxu0 %v1034
        %1096 = vmatpush2.bf16.msra.mxu0 %v1033
        %1097 = vmatprep.subr.bf16.mxu0 %v1032
        %1098 = vmatpush2.bf16.msra.mxu0 %v1031
        %1099 = vmatprep.subr.bf16.mxu0 %v1030
        %1100 = vmatpush2.bf16.msra.mxu0 %v1029
        %1101 = vmatprep.subr.bf16.mxu0 %v1028
        %1102 = vmatpush2.bf16.msra.mxu0 %v1027
        %1103 = vmatprep.subr.bf16.mxu0 %v1026
        %1104 = vmatpush2.bf16.msra.mxu0 %v1025
        %1105 = vmatprep.mubr.bf16.mxu0 %v868
        %1106 = vmatmul.mubr.bf16.gmra.mxu0 %v867
        %v1107 = vpop.f32.mrf.mxu0
        %v1108 = vadd.f32 %v906, %v1107
        %v1109 = vpop.f32.mrf.mxu0
        %v1110 = vadd.f32 %v910, %v1109
        %v1111 = vpop.f32.mrf.mxu0
        %v1112 = vadd.f32 %v906, %v1111
        %v1113 = vpop.f32.mrf.mxu0
        %v1114 = vadd.f32 %v910, %v1113
        %1115 = vdwg.mxu0
        %v1116 = vtanh.pop %v1108
        %v1117 = vtanh.pop %v1110
        %v1118 = vtanh.pop %v1112
        %v1119 = vtanh.pop %v1114
        %v1120 = vpack.c.bf16 %v1118, %v1116
        %v1121 = vpack.c.bf16 %v1119, %v1117
        %v1122 = vld [vmem:[%s9] sm:$0xf]
        %v1123 = vld [vmem:[%s9 + $0x4] sm:$0xf]
        %v1124 = vld [vmem:[%s9 + $0x8] sm:$0xf]
        %v1125 = vld [vmem:[%s9 + $0xc] sm:$0xf]
        %v1126 = vld [vmem:[%s9 + $0x10] sm:$0xf]
        %v1127 = vld [vmem:[%s9 + $0x14] sm:$0xf]
        %v1128 = vld [vmem:[%s9 + $0x18] sm:$0xf]
        %v1129 = vld [vmem:[%s9 + $0x1c] sm:$0xf]
        %v1130 = vld [vmem:[%s9 + $0x20] sm:$0xf]
        %v1131 = vld [vmem:[%s9 + $0x24] sm:$0xf]
        %v1132 = vld [vmem:[%s9 + $0x28] sm:$0xf]
        %v1133 = vld [vmem:[%s9 + $0x2c] sm:$0xf]
        %v1134 = vld [vmem:[%s9 + $0x30] sm:$0xf]
        %v1135 = vld [vmem:[%s9 + $0x34] sm:$0xf]
        %v1136 = vld [vmem:[%s9 + $0x38] sm:$0xf]
        %v1137 = vld [vmem:[%s9 + $0x3c] sm:$0xf]
        %v1138 = vld [vmem:[%s9 + $0x40] sm:$0xf]
        %v1139 = vld [vmem:[%s9 + $0x44] sm:$0xf]
        %v1140 = vld [vmem:[%s9 + $0x48] sm:$0xf]
        %v1141 = vld [vmem:[%s9 + $0x4c] sm:$0xf]
        %v1142 = vld [vmem:[%s9 + $0x50] sm:$0xf]
        %v1143 = vld [vmem:[%s9 + $0x54] sm:$0xf]
        %v1144 = vld [vmem:[%s9 + $0x58] sm:$0xf]
        %v1145 = vld [vmem:[%s9 + $0x5c] sm:$0xf]
        %v1146 = vld [vmem:[%s9 + $0x60] sm:$0xf]
        %v1147 = vld [vmem:[%s9 + $0x64] sm:$0xf]
        %v1148 = vld [vmem:[%s9 + $0x68] sm:$0xf]
        %v1149 = vld [vmem:[%s9 + $0x6c] sm:$0xf]
        %v1150 = vld [vmem:[%s9 + $0x70] sm:$0xf]
        %v1151 = vld [vmem:[%s9 + $0x74] sm:$0xf]
        %v1152 = vld [vmem:[%s9 + $0x78] sm:$0xf]
        %v1153 = vld [vmem:[%s9 + $0x7c] sm:$0xf]
        %v1154 = vld [vmem:[%s10] sm:$0x1]
        %v1156 = vlaneseq
        %v1157 = vshrl.u32 %v1156, 7
        %v1158 = vsub.s32 0, %v1157
        %v1159 = vrot.slane %v1154, %v1158
        %v1193 = vunpack.c.l.b16 %v1122
        %v1194 = vunpack.c.l.b16 %v1123
        %v1195 = vunpack.c.l.b16 %v1124
        %v1196 = vunpack.c.l.b16 %v1125
        %v1197 = vunpack.c.l.b16 %v1126
        %v1198 = vunpack.c.l.b16 %v1127
        %v1199 = vunpack.c.l.b16 %v1128
        %v1200 = vunpack.c.l.b16 %v1129
        %v1201 = vunpack.c.l.b16 %v1130
        %v1202 = vunpack.c.l.b16 %v1131
        %v1203 = vunpack.c.l.b16 %v1132
        %v1204 = vunpack.c.l.b16 %v1133
        %v1205 = vunpack.c.l.b16 %v1134
        %v1206 = vunpack.c.l.b16 %v1135
        %v1207 = vunpack.c.l.b16 %v1136
        %v1208 = vunpack.c.l.b16 %v1137
        %v1209 = vunpack.c.l.b16 %v1138
        %v1210 = vunpack.c.l.b16 %v1139
        %v1211 = vunpack.c.l.b16 %v1140
        %v1212 = vunpack.c.l.b16 %v1141
        %v1213 = vunpack.c.l.b16 %v1142
        %v1214 = vunpack.c.l.b16 %v1143
        %v1215 = vunpack.c.l.b16 %v1144
        %v1216 = vunpack.c.l.b16 %v1145
        %v1217 = vunpack.c.l.b16 %v1146
        %v1218 = vunpack.c.l.b16 %v1147
        %v1219 = vunpack.c.l.b16 %v1148
        %v1220 = vunpack.c.l.b16 %v1149
        %v1221 = vunpack.c.l.b16 %v1150
        %v1222 = vunpack.c.l.b16 %v1151
        %v1223 = vunpack.c.l.b16 %v1152
        %v1224 = vunpack.c.l.b16 %v1153
        %v1225 = vpack.c.b16 %v1194, %v1193
        %v1226 = vpack.c.b16 %v1196, %v1195
        %v1227 = vpack.c.b16 %v1198, %v1197
        %v1228 = vpack.c.b16 %v1200, %v1199
        %v1229 = vpack.c.b16 %v1202, %v1201
        %v1230 = vpack.c.b16 %v1204, %v1203
        %v1231 = vpack.c.b16 %v1206, %v1205
        %v1232 = vpack.c.b16 %v1208, %v1207
        %v1233 = vpack.c.b16 %v1210, %v1209
        %v1234 = vpack.c.b16 %v1212, %v1211
        %v1235 = vpack.c.b16 %v1214, %v1213
        %v1236 = vpack.c.b16 %v1216, %v1215
        %v1237 = vpack.c.b16 %v1218, %v1217
        %v1238 = vpack.c.b16 %v1220, %v1219
        %v1239 = vpack.c.b16 %v1222, %v1221
        %v1240 = vpack.c.b16 %v1224, %v1223
        %1257 = vmatprep.subr.bf16.mxu0 0
        %1258 = vmatpush1.bf16.msra.mxu0 %v1232
        %1259 = vmatprep.subr.bf16.mxu0 0
        %1260 = vmatpush1.bf16.msra.mxu0 %v1231
        %1261 = vmatprep.subr.bf16.mxu0 0
        %1262 = vmatpush1.bf16.msra.mxu0 %v1230
        %1263 = vmatprep.subr.bf16.mxu0 0
        %1264 = vmatpush1.bf16.msra.mxu0 %v1229
        %1265 = vmatprep.subr.bf16.mxu0 0
        %1266 = vmatpush1.bf16.msra.mxu0 %v1228
        %1267 = vmatprep.subr.bf16.mxu0 0
        %1268 = vmatpush1.bf16.msra.mxu0 %v1227
        %1269 = vmatprep.subr.bf16.mxu0 0
        %1270 = vmatpush1.bf16.msra.mxu0 %v1226
        %1271 = vmatprep.subr.bf16.mxu0 0
        %1272 = vmatpush1.bf16.msra.mxu0 %v1225
        %1273 = vmatprep.subr.bf16.mxu0 0
        %1274 = vmatpush2.bf16.msra.mxu0 %v1240
        %1275 = vmatprep.subr.bf16.mxu0 0
        %1276 = vmatpush2.bf16.msra.mxu0 %v1239
        %1277 = vmatprep.subr.bf16.mxu0 0
        %1278 = vmatpush2.bf16.msra.mxu0 %v1238
        %1279 = vmatprep.subr.bf16.mxu0 0
        %1280 = vmatpush2.bf16.msra.mxu0 %v1237
        %1281 = vmatprep.subr.bf16.mxu0 0
        %1282 = vmatpush2.bf16.msra.mxu0 %v1236
        %1283 = vmatprep.subr.bf16.mxu0 0
        %1284 = vmatpush2.bf16.msra.mxu0 %v1235
        %1285 = vmatprep.subr.bf16.mxu0 0
        %1286 = vmatpush2.bf16.msra.mxu0 %v1234
        %1287 = vmatprep.subr.bf16.mxu0 0
        %1288 = vmatpush2.bf16.msra.mxu0 %v1233
        %1289 = vmatprep.mubr.bf16.mxu0 %v1121
        %1290 = vmatmul.mubr.bf16.gmra.mxu0 %v1120
        %v1291 = vpop.f32.mrf.mxu0
        %v1292 = vadd.f32 %v1159, %v1291
        %v1293 = vpop.f32.mrf.mxu0
        %v1294 = vpop.f32.mrf.mxu0
        %v1295 = vadd.f32 %v1159, %v1294
        %v1296 = vpop.f32.mrf.mxu0
        %1297 = vdwg.mxu0
        %v1298 = vlaneseq
        %v1299 = vand.u32 %v1298, 127
        %vm1300 = vcmp.ge.s32.totalorder %v1299, 0
        %vm1301 = vcmp.lt.s32.totalorder %v1299, 5
        %vm1302 = vmand %vm1300, %vm1301
        %vm1303 = vcmp.ge.s32.totalorder %v1299, 5
        %vm1304 = vcmp.lt.s32.totalorder %v1299, 10
        %vm1305 = vmand %vm1303, %vm1304
        %vm1306 = vcmp.ge.s32.totalorder %v1299, 10
        %vm1307 = vcmp.lt.s32.totalorder %v1299, 15
        %vm1308 = vmand %vm1306, %vm1307
        %v1309 = vsel %vm1302, %v1292, -1e+30
        %v1310 = vsel %vm1302, %v1295, -1e+30
        %vm1311 = vcmask 121856
        %v1312 = vsel %vm1311, %v1309, -inf
        %1313 = vmax.xlane.f32.xlu0 %v1312
        %v1314 = vpop.xlane.xlu0 %1313
        %v1315 = vsel %vm1311, %v1310, -inf
        %1316 = vmax.xlane.f32.xlu0 %v1315
        %v1317 = vpop.xlane.xlu0 %1316
        %v1318 = vsel %vm1305, %v1292, -1e+30
        %v1319 = vsel %vm1305, %v1295, -1e+30
        %v1320 = vsel %vm1311, %v1318, -inf
        %1321 = vmax.xlane.f32.xlu0 %v1320
        %v1322 = vpop.xlane.xlu0 %1321
        %v1323 = vsel %vm1311, %v1319, -inf
        %1324 = vmax.xlane.f32.xlu0 %v1323
        %v1325 = vpop.xlane.xlu0 %1324
        %v1326 = vsel %vm1308, %v1292, -1e+30
        %v1327 = vsel %vm1308, %v1295, -1e+30
        %v1328 = vsel %vm1311, %v1326, -inf
        %1329 = vmax.xlane.f32.xlu0 %v1328
        %v1330 = vpop.xlane.xlu0 %1329
        %v1331 = vsel %vm1311, %v1327, -inf
        %1332 = vmax.xlane.f32.xlu0 %v1331
        %v1333 = vpop.xlane.xlu0 %1332
        %v1334 = vsel %vm1305, %v1322, %v1330
        %v1335 = vsel %vm1305, %v1325, %v1333
        %v1336 = vsel %vm1302, %v1314, %v1334
        %v1337 = vsel %vm1302, %v1317, %v1335
        %v1338 = vsub.f32 %v1292, %v1336
        %v1339 = vsub.f32 %v1295, %v1337
        %v1340 = vmul.f32 %v1338, 1.442695
        %v1341 = vpow.pop %v1340
        %v1342 = vmul.f32 %v1339, 1.442695
        %v1343 = vpow.pop %v1342
        %v1344 = vmul.f32 %v1341, %v1338
        %v1345 = vmul.f32 %v1343, %v1339
        %v1346 = vsel %vm1302, %v1341, 0.0
        %v1347 = vsel %vm1302, %v1343, 0.0
        %v1348 = vsel %vm1311, %v1346, 0.0
        %1349 = vadd.xlane.f32.xlu0 %v1348
        %v1350 = vpop.xlane.xlu0 %1349
        %v1351 = vsel %vm1311, %v1347, 0.0
        %1352 = vadd.xlane.f32.xlu0 %v1351
        %v1353 = vpop.xlane.xlu0 %1352
        %v1354 = vsel %vm1305, %v1341, 0.0
        %v1355 = vsel %vm1305, %v1343, 0.0
        %v1356 = vsel %vm1311, %v1354, 0.0
        %1357 = vadd.xlane.f32.xlu0 %v1356
        %v1358 = vpop.xlane.xlu0 %1357
        %v1359 = vsel %vm1311, %v1355, 0.0
        %1360 = vadd.xlane.f32.xlu0 %v1359
        %v1361 = vpop.xlane.xlu0 %1360
        %v1362 = vsel %vm1308, %v1341, 0.0
        %v1363 = vsel %vm1308, %v1343, 0.0
        %v1364 = vsel %vm1311, %v1362, 0.0
        %1365 = vadd.xlane.f32.xlu0 %v1364
        %v1366 = vpop.xlane.xlu0 %1365
        %v1367 = vsel %vm1311, %v1363, 0.0
        %1368 = vadd.xlane.f32.xlu0 %v1367
        %v1369 = vpop.xlane.xlu0 %1368
        %vm1370 = vcmask 7168
        %v1371 = vsel %vm1370, %v1350, %v1358
        %v1372 = vsel %vm1370, %v1353, %v1361
        %vm1373 = vcmask 15360
        %v1374 = vsel %vm1373, %v1371, %v1366
        %v1375 = vsel %vm1373, %v1372, %v1369
        %v1376 = vsel %vm1302, %v1344, 0.0
        %v1377 = vsel %vm1302, %v1345, 0.0
        %v1378 = vsel %vm1311, %v1376, 0.0
        %1379 = vadd.xlane.f32.xlu0 %v1378
        %v1380 = vpop.xlane.xlu0 %1379
        %v1381 = vsel %vm1311, %v1377, 0.0
        %1382 = vadd.xlane.f32.xlu0 %v1381
        %v1383 = vpop.xlane.xlu0 %1382
        %v1384 = vsel %vm1305, %v1344, 0.0
        %v1385 = vsel %vm1305, %v1345, 0.0
        %v1386 = vsel %vm1311, %v1384, 0.0
        %1387 = vadd.xlane.f32.xlu0 %v1386
        %v1388 = vpop.xlane.xlu0 %1387
        %v1389 = vsel %vm1311, %v1385, 0.0
        %1390 = vadd.xlane.f32.xlu0 %v1389
        %v1391 = vpop.xlane.xlu0 %1390
        %v1392 = vsel %vm1308, %v1344, 0.0
        %v1393 = vsel %vm1308, %v1345, 0.0
        %v1394 = vsel %vm1311, %v1392, 0.0
        %1395 = vadd.xlane.f32.xlu0 %v1394
        %v1396 = vpop.xlane.xlu0 %1395
        %v1397 = vsel %vm1311, %v1393, 0.0
        %1398 = vadd.xlane.f32.xlu0 %v1397
        %v1399 = vpop.xlane.xlu0 %1398
        %v1400 = vsel %vm1370, %v1380, %v1388
        %v1401 = vsel %vm1370, %v1383, %v1391
        %v1402 = vsel %vm1373, %v1400, %v1396
        %v1403 = vsel %vm1373, %v1401, %v1399
        %v1404 = vlog2.pop %v1374
        %v1405 = vmul.f32 %v1404, 0.6931472
        %v1406 = vlog2.pop %v1375
        %v1407 = vmul.f32 %v1406, 0.6931472
        %v1408 = vrcp.pop %v1374
        %v1409 = vrcp.pop %v1375
        %vm1410 = vcmask 23552
        %v1411 = vsel %vm1410, %v1405, 0.0
        %1412 = vadd.xlane.f32.xlu0 %v1411
        %v1413 = vpop.xlane.xlu0 %1412
        %v1414 = vsel %vm1410, %v1407, 0.0
        %1415 = vadd.xlane.f32.xlu0 %v1414
        %v1416 = vpop.xlane.xlu0 %1415
        %v1417 = vsub.f32 0.0, %v1413
        %v1418 = vsub.f32 0.0, %v1416
        %v1419 = vmul.f32 %v1402, %v1408
        %v1420 = vmul.f32 %v1403, %v1409
        %v1421 = vsub.f32 %v1405, %v1419
        %v1422 = vsub.f32 %v1407, %v1420
        %v1423 = vsel %vm1410, %v1421, 0.0
        %1424 = vadd.xlane.f32.xlu0 %v1423
        %v1425 = vpop.xlane.xlu0 %1424
        %v1426 = vsel %vm1410, %v1422, 0.0
        %1427 = vadd.xlane.f32.xlu0 %v1426
        %v1428 = vpop.xlane.xlu0 %1427
        %vm1429 = vcmp.eq.f32.partialorder %v1292, %v1336
        %vm1430 = vcmp.eq.f32.partialorder %v1295, %v1337
        %vm1431 = vmand %vm1429, %vm1302
        %vm1432 = vmand %vm1430, %vm1302
        %v1433 = vsel %vm1431, %v1299, 5
        %v1434 = vsel %vm1432, %v1299, 5
        %v1435 = vsel %vm1311, %v1433, 2147483647
        %v1436 = vand.u32 %v1435, 65535
        %v1437 = vshra.s32 %v1435, 16
        %v1438 = vcvt.s32.f32 %v1436
        %v1439 = vcvt.s32.f32 %v1437
        %1440 = vmin.xlane.f32.xlu0 %v1439
        %v1441 = vpop.xlane.xlu0 %1440
        %vm1442 = vcmp.eq.f32.partialorder %v1439, %v1441
        %v1443 = vsel %vm1442, %v1438, inf
        %1444 = vmin.xlane.f32.xlu0 %v1443
        %v1445 = vpop.xlane.xlu0 %1444
        %v1446 = vcvt.f32.s32 %v1445
        %v1447 = vcvt.f32.s32 %v1441
        %v1448 = vshll.u32 %v1447, 16
        %v1449 = vadd.s32 %v1448, %v1446
        %v1450 = vsel %vm1311, %v1434, 2147483647
        %v1451 = vand.u32 %v1450, 65535
        %v1452 = vshra.s32 %v1450, 16
        %v1453 = vcvt.s32.f32 %v1451
        %v1454 = vcvt.s32.f32 %v1452
        %1455 = vmin.xlane.f32.xlu0 %v1454
        %v1456 = vpop.xlane.xlu0 %1455
        %vm1457 = vcmp.eq.f32.partialorder %v1454, %v1456
        %v1458 = vsel %vm1457, %v1453, inf
        %1459 = vmin.xlane.f32.xlu0 %v1458
        %v1460 = vpop.xlane.xlu0 %1459
        %v1461 = vcvt.f32.s32 %v1460
        %v1462 = vcvt.f32.s32 %v1456
        %v1463 = vshll.u32 %v1462, 16
        %v1464 = vadd.s32 %v1463, %v1461
        %vm1465 = vmand %vm1429, %vm1305
        %vm1466 = vmand %vm1430, %vm1305
        %v1467 = vsub.s32 %v1299, 5
        %v1468 = vsel %vm1465, %v1467, 5
        %v1469 = vsel %vm1466, %v1467, 5
        %v1470 = vsel %vm1311, %v1468, 2147483647
        %v1471 = vand.u32 %v1470, 65535
        %v1472 = vshra.s32 %v1470, 16
        %v1473 = vcvt.s32.f32 %v1471
        %v1474 = vcvt.s32.f32 %v1472
        %1475 = vmin.xlane.f32.xlu0 %v1474
        %v1476 = vpop.xlane.xlu0 %1475
        %vm1477 = vcmp.eq.f32.partialorder %v1474, %v1476
        %v1478 = vsel %vm1477, %v1473, inf
        %1479 = vmin.xlane.f32.xlu0 %v1478
        %v1480 = vpop.xlane.xlu0 %1479
        %v1481 = vcvt.f32.s32 %v1480
        %v1482 = vcvt.f32.s32 %v1476
        %v1483 = vshll.u32 %v1482, 16
        %v1484 = vadd.s32 %v1483, %v1481
        %v1485 = vsel %vm1311, %v1469, 2147483647
        %v1486 = vand.u32 %v1485, 65535
        %v1487 = vshra.s32 %v1485, 16
        %v1488 = vcvt.s32.f32 %v1486
        %v1489 = vcvt.s32.f32 %v1487
        %1490 = vmin.xlane.f32.xlu0 %v1489
        %v1491 = vpop.xlane.xlu0 %1490
        %vm1492 = vcmp.eq.f32.partialorder %v1489, %v1491
        %v1493 = vsel %vm1492, %v1488, inf
        %1494 = vmin.xlane.f32.xlu0 %v1493
        %v1495 = vpop.xlane.xlu0 %1494
        %v1496 = vcvt.f32.s32 %v1495
        %v1497 = vcvt.f32.s32 %v1491
        %v1498 = vshll.u32 %v1497, 16
        %v1499 = vadd.s32 %v1498, %v1496
        %vm1500 = vmand %vm1429, %vm1308
        %vm1501 = vmand %vm1430, %vm1308
        %v1502 = vsub.s32 %v1299, 10
        %v1503 = vsel %vm1500, %v1502, 5
        %v1504 = vsel %vm1501, %v1502, 5
        %v1505 = vsel %vm1311, %v1503, 2147483647
        %v1506 = vand.u32 %v1505, 65535
        %v1507 = vshra.s32 %v1505, 16
        %v1508 = vcvt.s32.f32 %v1506
        %v1509 = vcvt.s32.f32 %v1507
        %1510 = vmin.xlane.f32.xlu0 %v1509
        %v1511 = vpop.xlane.xlu0 %1510
        %vm1512 = vcmp.eq.f32.partialorder %v1509, %v1511
        %v1513 = vsel %vm1512, %v1508, inf
        %1514 = vmin.xlane.f32.xlu0 %v1513
        %v1515 = vpop.xlane.xlu0 %1514
        %v1516 = vcvt.f32.s32 %v1515
        %v1517 = vcvt.f32.s32 %v1511
        %v1518 = vshll.u32 %v1517, 16
        %v1519 = vadd.s32 %v1518, %v1516
        %v1520 = vsel %vm1311, %v1504, 2147483647
        %v1521 = vand.u32 %v1520, 65535
        %v1522 = vshra.s32 %v1520, 16
        %v1523 = vcvt.s32.f32 %v1521
        %v1524 = vcvt.s32.f32 %v1522
        %1525 = vmin.xlane.f32.xlu0 %v1524
        %v1526 = vpop.xlane.xlu0 %1525
        %vm1527 = vcmp.eq.f32.partialorder %v1524, %v1526
        %v1528 = vsel %vm1527, %v1523, inf
        %1529 = vmin.xlane.f32.xlu0 %v1528
        %v1530 = vpop.xlane.xlu0 %1529
        %v1531 = vcvt.f32.s32 %v1530
        %v1532 = vcvt.f32.s32 %v1526
        %v1533 = vshll.u32 %v1532, 16
        %v1534 = vadd.s32 %v1533, %v1531
        %v1535 = vsel %vm1370, %v1449, %v1484
        %v1536 = vsel %vm1370, %v1464, %v1499
        %v1537 = vsel %vm1373, %v1535, %v1519
        %v1538 = vsel %vm1373, %v1536, %v1534
        %1539 = vst.msk [vmem:[%s460] sm:$0xff] %vm1410, %v1537
        %1540 = vst.msk [vmem:[%s460 + $0x8] sm:$0xff] %vm1410, %v1538
        %vm1541 = vcmp.eq.s32.totalorder %v1299, 0
        %vm1542 = vcmp.eq.s32.totalorder %v1299, 1
        %1544 = vset.pattern.permute.xlu0 15
        %1545 = vperm.xlu0 %1544, %v1292
        %v1546 = vpop.permute.xlu0 %1545
        %1549 = vset.pattern.permute.xlu0 15
        %1550 = vperm.xlu0 %1549, %v1295
        %v1551 = vpop.permute.xlu0 %1550
        %v1553 = vsel %vm1542, %v1425, %v1546
        %v1554 = vsel %vm1542, %v1428, %v1551
        %v1555 = vsel %vm1541, %v1417, %v1553
        %v1556 = vsel %vm1541, %v1418, %v1554
        %1557 = vst.msk [vmem:[%s466] sm:$0xff] %vm1410, %v1555
        %1558 = vst.msk [vmem:[%s466 + $0x8] sm:$0xff] %vm1410, %v1556
        %s1559 = smul.u32 2, %s25
        %p1560 = scmp.lt.s32.totalorder %s1559, 5
        %s1561 = scalar_select %p1560, %s1559, 5
        %s1562 = smul.addr %s1561, 8
        %s1563 = scalar_lea.vmem %s11, %s1562
        %s1564 = smul.u32 2, %s25
        %p1565 = scmp.lt.s32.totalorder %s1564, 5
        %s1566 = scalar_select %p1565, %s1564, 5
        %s1567 = smul.addr %s1566, 8
        %s1568 = scalar_lea.vmem %s12, %s1567
        // Predicated region
        $region69: #{_agent_forward_2d.1} parent=63 // pred_check
          %p1569 = pneg %p284
        $region70: #{_agent_forward_2d.1} parent=63 // pred_check_branch
          %1571 = sbr.rel (%p1569) target = $region72
        $region71: #{_agent_forward_2d.1} parent=63 // pred_region
          %s1572 = smul.u32 2, %s25
        $region72: #{_agent_forward_2d.1} parent=63 // pred_fallthru
          _
        // Predicated region
        $region73: #{_agent_forward_2d.1} parent=63 // pred_check
          %p1573 = pneg %p310
        $region74: #{_agent_forward_2d.1} parent=63 // pred_check_branch
          %1575 = sbr.rel (%p1573) target = $region76
        $region75: #{_agent_forward_2d.1} parent=63 // pred_region
          %s1576 = smul.u32 2, %s25
        $region76: #{_agent_forward_2d.1} parent=63 // pred_fallthru
          _
      $region64: #{_agent_forward_2d.1} parent=5 // pred_fallthru
        _
      %p1577 = scmp.le.s32.totalorder 2, %s20
      // Predicated region
      $region77: #{_agent_forward_2d.1} parent=5 // pred_check
        %p1578 = pneg %p1577
      $region78: #{_agent_forward_2d.1} parent=5 // pred_check_branch
        %1580 = sbr.rel (%p1578) target = $region80
      $region79: #{_agent_forward_2d.1} parent=5 // pred_region
        %s1581 = ssub.s32 %s20, 2
        // Predicated region
        $region81: #{_agent_forward_2d.1} parent=79 // pred_check
          %p1582 = pneg %p290
        $region82: #{_agent_forward_2d.1} parent=79 // pred_check_branch
          %1584 = sbr.rel (%p1582) target = $region84
        $region83: #{_agent_forward_2d.1} parent=79 // pred_region
          %s1585 = smul.u32 2, %s26
          %p1586 = scmp.lt.s32.totalorder %s1585, 5
          %s1587 = scalar_select %p1586, %s1585, 5
          %s1588 = smul.addr %s1587, 8
          %s1589 = scalar_lea.vmem %s11, %s1588
        $region84: #{_agent_forward_2d.1} parent=79 // pred_fallthru
          _
        // Predicated region
        $region85: #{_agent_forward_2d.1} parent=79 // pred_check
          %p1590 = pneg %p316
        $region86: #{_agent_forward_2d.1} parent=79 // pred_check_branch
          %1592 = sbr.rel (%p1590) target = $region88
        $region87: #{_agent_forward_2d.1} parent=79 // pred_region
          %s1593 = smul.u32 2, %s26
          %p1594 = scmp.lt.s32.totalorder %s1593, 5
          %s1595 = scalar_select %p1594, %s1593, 5
          %s1596 = smul.addr %s1595, 8
          %s1597 = scalar_lea.vmem %s12, %s1596
        $region88: #{_agent_forward_2d.1} parent=79 // pred_fallthru
          _
      $region80: #{_agent_forward_2d.1} parent=5 // pred_fallthru
        _
    $region6: #{_agent_forward_2d.1} parent=1 // loop_footer
      %s24 = sadd.s32 1, %s20
    $region7: #{_agent_forward_2d.1} parent=1 // loop_footer_branch
      %19 = sbr.rel target = $region3
    $region8: #{_agent_forward_2d.1} parent=1 // loop_exit
      _
    %1598 = vsyncpa [#allocation3], 1
    %s1599 = scalar_lea.sflag [#allocation3], 1
    %1600 = vsyncpa %s1599, 1

</llo_original>
